<compile_context>
chip_gen: v6e
topology: v6e:2x2x1
jax: 0.10.0
libtpu: 0.0.40
codegen_flags: <defaults>
</compile_context>

<pallas_src>
import math

import jax
import jax.numpy as jnp
from jax import lax
from jax.experimental import pallas as pl
from jax.experimental.pallas import tpu as pltpu
from jax.scipy.special import erf as _erf_exact

LN_EPS = 1e-5            # torch.nn.LayerNorm default eps
MASK_VALUE = -1e30       # large finite negative instead of -inf (NaN-safe)
_GELU_K = math.sqrt(2.0 / math.pi)


def _resolve_vmem_limit():
    # Resolved once at import (review: no per-call capability probing).  ~75% of the
    # physical per-core VMEM: ~48 MiB on v7x (64 MiB), ~96 MiB on v5e/v6e (128 MiB).
    try:
        cap = getattr(pltpu.get_tpu_info(), "vmem_capacity_bytes", None)
        if cap:
            return int(min(cap * 3 // 4, 100 * 1024 * 1024))
    except Exception:
        pass
    return 64 * 1024 * 1024


VMEM_LIMIT_BYTES = _resolve_vmem_limit()


# ---------------------------------------------------------------------------
# Elementwise helpers (pure jnp -> usable inside the kernels).
# ---------------------------------------------------------------------------
def _layer_norm(x, g, b):
    mu = jnp.mean(x, axis=-1, keepdims=True)
    xc = x - mu
    var = jnp.mean(xc * xc, axis=-1, keepdims=True)
    return xc * lax.rsqrt(var + LN_EPS) * g + b


def _gelu_tanh(x):
    # TODO(synk): torch.nn.GELU defaults to the exact erf form; the tanh approximation
    # (max abs deviation ~1e-3) is used per the perf review (tanh lowers to the EUP
    # slot, keeping the MLP finalize MXU-bound instead of VALU-bound).
    return 0.5 * x * (1.0 + jnp.tanh(_GELU_K * (x + 0.044715 * (x * x * x))))


# ---------------------------------------------------------------------------
# Kernel 1: LN1 + Q/K/V projections for one (batch, row-tile); head-major output.
# ---------------------------------------------------------------------------
def ln_qkv_kernel(x_ref, ln1g, ln1b, wq, bq, wk, bk, wv, bv,
                  q_ref, k_ref, v_ref):
    x = x_ref[0]                               # (TR, C) f32
    TR, C = x.shape
    H = q_ref.shape[1]
    Dh = q_ref.shape[3]
    scale = 1.0 / math.sqrt(Dh)

    xn = _layer_norm(x, ln1g[...], ln1b[...])  # f32
    xm = xn.astype(wq.dtype)                   # bf16 (or f32) MXU input
    q = jnp.dot(xm, wq[...], preferred_element_type=jnp.float32) + bq[...]
    k = jnp.dot(xm, wk[...], preferred_element_type=jnp.float32) + bk[...]
    v = jnp.dot(xm, wv[...], preferred_element_type=jnp.float32) + bv[...]
    q = q * scale                              # fold 1/sqrt(Dh) into q once

    # TODO(synk): head-major (H, TR, Dh) stores have a Dh-wide (often 64) lane dim;
    # packing head pairs into a 128-lane layout would make these stores lane-dense.
    def to_heads(a):                           # (TR, C) -> (H, TR, Dh)
        return a.reshape(TR, H, Dh).transpose(1, 0, 2)

    q_ref[0] = to_heads(q).astype(q_ref.dtype)
    k_ref[0] = to_heads(k).astype(k_ref.dtype)
    v_ref[0] = to_heads(v).astype(v_ref.dtype)


# ---------------------------------------------------------------------------
# Kernel 2: resident-KV causal flash attention + out-proj + residual + LN2 + MLP.
# grid = (B, q_tiles); the KV reduction is an in-kernel loop over only the causally
# needed KV tiles (no dead grid steps, K/V DMA'd once per batch element).
# ---------------------------------------------------------------------------
def _make_attn_mlp_kernel(TK):
    def attn_mlp_kernel(x_ref, q_ref, k_ref, v_ref,
                        wp, bp, ln2g, ln2b, w1, b1, w2, b2,
                        o_ref, m_sc, l_sc, acc_sc):
        qi = pl.program_id(1)
        H = q_ref.shape[1]
        TQ = q_ref.shape[2]
        Dh = q_ref.shape[3]

        m_sc[...] = jnp.full(m_sc.shape, MASK_VALUE, jnp.float32)
        l_sc[...] = jnp.zeros(l_sc.shape, jnp.float32)
        acc_sc[...] = jnp.zeros(acc_sc.shape, jnp.float32)

        q = q_ref[0]                                   # (H, TQ, Dh), pre-scaled

        row0 = qi * TQ                                 # first global query row
        n_full = row0 // TK                            # fully-unmasked KV tiles
        n_keep = (row0 + TQ + TK - 1) // TK            # tiles touching the causal band
        # Tiles >= n_keep are fully masked and are never visited at all.

        def _kv_tile(kv):
            start = pl.multiple_of(kv * TK, TK)
            k_t = k_ref[0, :, pl.ds(start, TK), :]     # (H, TK, Dh)
            v_t = v_ref[0, :, pl.ds(start, TK), :]
            # batched over heads; contraction on Dh (no materialized k^T)
            s = lax.dot_general(q, k_t, (((2,), (2,)), ((0,), (0,))),
                                preferred_element_type=jnp.float32)  # (H, TQ, TK)
            return s, v_t

        def _online_update(s, v_t):
            m_prev = m_sc[...]                                       # (H, TQ, 1)
            m_new = jnp.maximum(m_prev, jnp.max(s, axis=-1, keepdims=True))
            alpha = jnp.exp(m_prev - m_new)
            p = jnp.exp(s - m_new)                                   # (H, TQ, TK)
            l_sc[...] = alpha * l_sc[...] + jnp.sum(p, axis=-1, keepdims=True)
            pv = lax.dot_general(p.astype(v_t.dtype), v_t,
                                 (((2,), (1,)), ((0,), (0,))),
                                 preferred_element_type=jnp.float32)  # (H, TQ, Dh)
            acc_sc[...] = alpha * acc_sc[...] + pv
            m_sc[...] = m_new

        def _full_body(kv, carry):                     # strictly below the diagonal
            s, v_t = _kv_tile(kv)
            _online_update(s, v_t)
            return carry

        def _masked_body(kv, carry):                   # tiles crossing the diagonal
            s, v_t = _kv_tile(kv)
            row = row0 + lax.broadcasted_iota(jnp.int32, (TQ, TK), 0)
            col = kv * TK + lax.broadcasted_iota(jnp.int32, (TQ, TK), 1)
            s = jnp.where((col <= row)[None], s, MASK_VALUE)         # global-index mask
            _online_update(s, v_t)
            return carry

        lax.fori_loop(0, n_full, _full_body, 0)
        lax.fori_loop(n_full, n_keep, _masked_body, 0)

        # ---- finalize: out-proj + residual + LN2 + MLP + residual ----
        inv_l = pl.reciprocal(l_sc[...], approx=False)               # (H, TQ, 1)
        y_h = (acc_sc[...] * inv_l).astype(wp.dtype)                 # (H, TQ, Dh)
        y = y_h.transpose(1, 0, 2).reshape(TQ, H * Dh)               # (TQ, C)
        y = jnp.dot(y, wp[...], preferred_element_type=jnp.float32) + bp[...]
        x2 = x_ref[0] + y                                            # residual, f32
        x2n = _layer_norm(x2, ln2g[...], ln2b[...])
        h1 = jnp.dot(x2n.astype(w1.dtype), w1[...],
                     preferred_element_type=jnp.float32) + b1[...]
        h1 = _gelu_tanh(h1)
        # TODO(synk): for very large C/FF (v7x 64 MiB VMEM) w1/w2 should be FF-tiled
        # (streamed) instead of kept fully resident.
        h2 = jnp.dot(h1.astype(w2.dtype), w2[...],
                     preferred_element_type=jnp.float32) + b2[...]
        o_ref[0] = (x2 + h2).astype(o_ref.dtype)

    return attn_mlp_kernel


# ---------------------------------------------------------------------------
# Wrapper
# ---------------------------------------------------------------------------
PARAMS_QKV = ("ln1_g", "ln1_b", "wq", "bq", "wk", "bk", "wv", "bv")
PARAMS_MLP = ("wp", "bp", "ln2_g", "ln2_b", "w1", "b1", "w2", "b2")


def _const_index_map(ndim):
    def idx(*_):
        return (0,) * ndim
    return idx


def _weight_spec(a):
    # Constant block index -> the block is DMA'd once and then stays resident.
    return pl.BlockSpec(a.shape, _const_index_map(a.ndim))


def _pick_tile(T, cap):
    if T <= cap:
        return T
    for t in (cap, 256, 128):
        if T % t == 0:
            return t
    raise ValueError(f"T={T} must be <= {cap} or a multiple of 128")


def _prep_params(params, param_dtype):
    out = dict(params)
    for name in ("wq", "wk", "wv", "wp", "w1", "w2"):   # matmul weights -> bf16/f32
        out[name] = params[name].astype(param_dtype)
    return out                                          # LN params & biases stay f32


def block_forward(x, params, n_head, *, param_dtype=jnp.bfloat16):
    B, T, C = x.shape
    assert C % n_head == 0
    H, Dh = n_head, C // n_head

    TQ = _pick_tile(T, 256)           # query rows per grid step
    TK = _pick_tile(T, 256)           # KV rows per in-kernel step (256-wide MXU)
    nQ = T // TQ

    p = _prep_params(params, param_dtype)

    def cparams(sem):
        return pltpu.CompilerParams(dimension_semantics=sem,
                                    vmem_limit_bytes=VMEM_LIMIT_BYTES)

    # ---- kernel 1: LN1 + Q/K/V projections (head-major output) ----
    qkv_args = [p[n] for n in PARAMS_QKV]
    q, k, v = pl.pallas_call(
        ln_qkv_kernel,
        out_shape=tuple(jax.ShapeDtypeStruct((B, H, T, Dh), param_dtype)
                        for _ in range(3)),
        grid_spec=pltpu.PrefetchScalarGridSpec(
            num_scalar_prefetch=0,
            grid=(B, nQ),
            in_specs=[pl.BlockSpec((1, TQ, C), lambda b, t: (b, t, 0))]
                     + [_weight_spec(a) for a in qkv_args],
            out_specs=[pl.BlockSpec((1, H, TQ, Dh), lambda b, t: (b, 0, t, 0))] * 3),
        compiler_params=cparams(("parallel", "parallel")),
    )(x, *qkv_args)

    # ---- kernel 2: resident-KV flash attention + out-proj + residual + LN2 + MLP ----
    # K/V index map is constant in the q-tile index -> DMA'd once per batch element.
    # TODO(synk): for huge T*C on v7x (64 MiB VMEM) the resident K/V block should be
    # gated and fall back to a KV-tiled grid.
    mlp_args = [p[n] for n in PARAMS_MLP]
    kv_spec = pl.BlockSpec((1, H, T, Dh), lambda b, qi: (b, 0, 0, 0))
    in_specs = [
        pl.BlockSpec((1, TQ, C), lambda b, qi: (b, qi, 0)),           # x (residual)
        pl.BlockSpec((1, H, TQ, Dh), lambda b, qi: (b, 0, qi, 0)),    # q
        kv_spec,                                                      # k (resident)
        kv_spec,                                                      # v (resident)
    ] + [_weight_spec(a) for a in mlp_args]

    out = pl.pallas_call(
        _make_attn_mlp_kernel(TK),
        out_shape=jax.ShapeDtypeStruct((B, T, C), x.dtype),
        grid_spec=pltpu.PrefetchScalarGridSpec(
            num_scalar_prefetch=0,
            grid=(B, nQ),
            in_specs=in_specs,
            out_specs=pl.BlockSpec((1, TQ, C), lambda b, qi: (b, qi, 0)),
            scratch_shapes=[pltpu.VMEM((H, TQ, 1), jnp.float32),    # m
                            pltpu.VMEM((H, TQ, 1), jnp.float32),    # l
                            pltpu.VMEM((H, TQ, Dh), jnp.float32)]), # acc
        compiler_params=cparams(("parallel", "parallel")),
    )(x, q, k, v, *mlp_args)
    return out


# ---------------------------------------------------------------------------
# Deterministic parameter init (shapes follow Block.__init__ with n_embd=C,
# dim_feedforward=FF).  Linear weights stored pre-transposed (in, out), f32.
# ---------------------------------------------------------------------------
def init_params(key, C, FF):
    ks = jax.random.split(key, 16)
    w = lambda k, shape: 0.02 * jax.random.normal(k, shape, jnp.float32)
    return dict(
        ln1_g=1.0 + 0.05 * jax.random.normal(ks[12], (1, C), jnp.float32),
        ln1_b=0.05 * jax.random.normal(ks[13], (1, C), jnp.float32),
        wq=w(ks[0], (C, C)), bq=w(ks[1], (1, C)),
        wk=w(ks[2], (C, C)), bk=w(ks[3], (1, C)),
        wv=w(ks[4], (C, C)), bv=w(ks[5], (1, C)),
        wp=w(ks[6], (C, C)), bp=w(ks[7], (1, C)),
        ln2_g=1.0 + 0.05 * jax.random.normal(ks[14], (1, C), jnp.float32),
        ln2_b=0.05 * jax.random.normal(ks[15], (1, C), jnp.float32),
        w1=w(ks[8], (C, FF)), b1=w(ks[9], (1, FF)),
        w2=w(ks[10], (FF, C)), b2=w(ks[11], (1, C)),
    )


# Pure-JAX f32 reference (torch-faithful math: exact erf GELU, full softmax).
def block_reference(x, p, n_head):
    B, T, C = x.shape
    Dh = C // n_head
    xn = _layer_norm(x, p["ln1_g"], p["ln1_b"])
    q = xn @ p["wq"] + p["bq"]
    k = xn @ p["wk"] + p["bk"]
    v = xn @ p["wv"] + p["bv"]
    q = q.reshape(B, T, n_head, Dh).transpose(0, 2, 1, 3)
    k = k.reshape(B, T, n_head, Dh).transpose(0, 2, 1, 3)
    v = v.reshape(B, T, n_head, Dh).transpose(0, 2, 1, 3)
    att = (q @ k.transpose(0, 1, 3, 2)) * (1.0 / math.sqrt(Dh))
    causal = jnp.tril(jnp.ones((T, T), bool))
    att = jnp.where(causal[None, None], att, -jnp.inf)
    att = att - jnp.max(att, axis=-1, keepdims=True)
    att = jnp.exp(att)
    att = att / jnp.sum(att, axis=-1, keepdims=True)
    y = (att @ v).transpose(0, 2, 1, 3).reshape(B, T, C)
    y = y @ p["wp"] + p["bp"]
    x2 = x + y
    x2n = _layer_norm(x2, p["ln2_g"], p["ln2_b"])
    h = 0.5 * (x2n @ p["w1"] + p["b1"]) * (1.0 + _erf_exact((x2n @ p["w1"] + p["b1"])
                                                            * (1.0 / math.sqrt(2.0))))
    return x2 + (h @ p["w2"] + p["b2"])


if __name__ == "__main__":
    key = jax.random.PRNGKey(0)

    # --- small config (single q/kv tile) ---
    B, T, C, FF, H = 2, 8, 32, 64, 4
    kx, kp, kx2, kp2 = jax.random.split(key, 4)
    x = jax.random.normal(kx, (B, T, C), jnp.float32)
    params = init_params(kp, C, FF)
    ref = block_reference(x, params, H)

    out_f32 = jax.block_until_ready(block_forward(x, params, H, param_dtype=jnp.float32))
    assert out_f32.shape == (B, T, C)
    err32 = float(jnp.max(jnp.abs(out_f32 - ref)))
    assert jnp.allclose(out_f32, ref, atol=2e-3, rtol=2e-3), f"f32 max abs err {err32}"

    out_bf16 = jax.block_until_ready(block_forward(x, params, H, param_dtype=jnp.bfloat16))
    errbf = float(jnp.max(jnp.abs(out_bf16 - ref)))
    assert jnp.allclose(out_bf16, ref, atol=2e-2, rtol=2e-2), f"bf16 max abs err {errbf}"

    # --- multi-tile config (exercises the in-kernel KV loops + global-index mask) ---
    B2, T2, C2, FF2, H2 = 1, 512, 64, 128, 4
    x2 = jax.random.normal(kx2, (B2, T2, C2), jnp.float32)
    params2 = init_params(kp2, C2, FF2)
    ref2 = block_reference(x2, params2, H2)
    out2 = jax.block_until_ready(block_forward(x2, params2, H2, param_dtype=jnp.float32))
    err2 = float(jnp.max(jnp.abs(out2 - ref2)))
    assert jnp.allclose(out2, ref2, atol=2e-3, rtol=2e-3), f"multi-tile max abs err {err2}"

    print("KERNEL_OK")
</pallas_src>

<mosaic_0001>
module attributes {stable_mosaic.version = 11 : i64} {
  func.func @ln_qkv_kernel(%arg0: i32, %arg1: i32, %arg2: memref<1x8x32xf32, #tpu.memory_space<vmem>>, %arg3: memref<1x32xf32, #tpu.memory_space<vmem>>, %arg4: memref<1x32xf32, #tpu.memory_space<vmem>>, %arg5: memref<32x32xf32, #tpu.memory_space<vmem>>, %arg6: memref<1x32xf32, #tpu.memory_space<vmem>>, %arg7: memref<32x32xf32, #tpu.memory_space<vmem>>, %arg8: memref<1x32xf32, #tpu.memory_space<vmem>>, %arg9: memref<32x32xf32, #tpu.memory_space<vmem>>, %arg10: memref<1x32xf32, #tpu.memory_space<vmem>>, %arg11: memref<1x4x8x8xf32, #tpu.memory_space<vmem>>, %arg12: memref<1x4x8x8xf32, #tpu.memory_space<vmem>>, %arg13: memref<1x4x8x8xf32, #tpu.memory_space<vmem>>) attributes {dimension_semantics = [#tpu.dimension_semantics<parallel>, #tpu.dimension_semantics<parallel>], iteration_bounds = array<i64: 2, 1>, scalar_prefetch = 0 : i64, scratch_operands = 0 : i64, tpu.core_type = #tpu.core_type<tc>, window_params = [{transform_indices = @transform_0, window_bounds = array<i64: 1, 8, 32>}, {pipeline_mode = #tpu.pipeline_mode<synchronous>, transform_indices = @transform_1, window_bounds = array<i64: 1, 32>}, {pipeline_mode = #tpu.pipeline_mode<synchronous>, transform_indices = @transform_2, window_bounds = array<i64: 1, 32>}, {pipeline_mode = #tpu.pipeline_mode<synchronous>, transform_indices = @transform_3, window_bounds = array<i64: 32, 32>}, {pipeline_mode = #tpu.pipeline_mode<synchronous>, transform_indices = @transform_4, window_bounds = array<i64: 1, 32>}, {pipeline_mode = #tpu.pipeline_mode<synchronous>, transform_indices = @transform_5, window_bounds = array<i64: 32, 32>}, {pipeline_mode = #tpu.pipeline_mode<synchronous>, transform_indices = @transform_6, window_bounds = array<i64: 1, 32>}, {pipeline_mode = #tpu.pipeline_mode<synchronous>, transform_indices = @transform_7, window_bounds = array<i64: 32, 32>}, {pipeline_mode = #tpu.pipeline_mode<synchronous>, transform_indices = @transform_8, window_bounds = array<i64: 1, 32>}, {transform_indices = @transform_9, window_bounds = array<i64: 1, 4, 8, 8>}, {transform_indices = @transform_10, window_bounds = array<i64: 1, 4, 8, 8>}, {transform_indices = @transform_11, window_bounds = array<i64: 1, 4, 8, 8>}]} {
    %c0 = arith.constant 0 : index
    %c0_0 = arith.constant 0 : index
    %c0_1 = arith.constant 0 : index
    %0 = vector.load %arg2[%c0, %c0_0, %c0_1] : memref<1x8x32xf32, #tpu.memory_space<vmem>>, vector<1x8x32xf32>
    %1 = vector.shape_cast %0 : vector<1x8x32xf32> to vector<8x32xf32>
    %c0_2 = arith.constant 0 : index
    %c0_3 = arith.constant 0 : index
    %2 = vector.load %arg3[%c0_2, %c0_3] : memref<1x32xf32, #tpu.memory_space<vmem>>, vector<1x32xf32>
    %c0_4 = arith.constant 0 : index
    %c0_5 = arith.constant 0 : index
    %3 = vector.load %arg4[%c0_4, %c0_5] : memref<1x32xf32, #tpu.memory_space<vmem>>, vector<1x32xf32>
    %cst = arith.constant dense<0.000000e+00> : vector<8xf32>
    %4 = vector.multi_reduction <add>, %1, %cst [1] : vector<8x32xf32> to vector<8xf32>
    %5 = vector.shape_cast %4 : vector<8xf32> to vector<8x1xf32>
    %cst_6 = arith.constant 3.200000e+01 : f32
    %6 = vector.broadcast %cst_6 : f32 to vector<8x1xf32>
    %7 = arith.divf %5, %6 : vector<8x1xf32>
    %8 = vector.broadcast %7 : vector<8x1xf32> to vector<8x32xf32>
    %9 = arith.subf %1, %8 : vector<8x32xf32>
    %10 = arith.mulf %9, %9 : vector<8x32xf32>
    %cst_7 = arith.constant dense<0.000000e+00> : vector<8xf32>
    %11 = vector.multi_reduction <add>, %10, %cst_7 [1] : vector<8x32xf32> to vector<8xf32>
    %12 = vector.shape_cast %11 : vector<8xf32> to vector<8x1xf32>
    %cst_8 = arith.constant 3.200000e+01 : f32
    %13 = vector.broadcast %cst_8 : f32 to vector<8x1xf32>
    %14 = arith.divf %12, %13 : vector<8x1xf32>
    %cst_9 = arith.constant 9.99999974E-6 : f32
    %15 = vector.broadcast %cst_9 : f32 to vector<8x1xf32>
    %16 = arith.addf %14, %15 : vector<8x1xf32>
    %17 = math.rsqrt %16 : vector<8x1xf32>
    %18 = vector.broadcast %17 : vector<8x1xf32> to vector<8x32xf32>
    %19 = arith.mulf %9, %18 : vector<8x32xf32>
    %20 = vector.broadcast %2 : vector<1x32xf32> to vector<8x32xf32>
    %21 = arith.mulf %19, %20 : vector<8x32xf32>
    %22 = vector.broadcast %3 : vector<1x32xf32> to vector<8x32xf32>
    %23 = arith.addf %21, %22 : vector<8x32xf32>
    %c0_10 = arith.constant 0 : index
    %c0_11 = arith.constant 0 : index
    %24 = vector.load %arg5[%c0_10, %c0_11] : memref<32x32xf32, #tpu.memory_space<vmem>>, vector<32x32xf32>
    %cst_12 = arith.constant dense<0.000000e+00> : vector<8x32xf32>
    %25 = tpu.matmul %23, %24, %cst_12 {dimension_numbers = #tpu.dot_dimension_numbers<[1], [0], [0], [1], [0, 0, 1, 1], [], []>} : vector<8x32xf32>, vector<32x32xf32>, vector<8x32xf32> -> vector<8x32xf32>
    %c0_13 = arith.constant 0 : index
    %c0_14 = arith.constant 0 : index
    %26 = vector.load %arg6[%c0_13, %c0_14] : memref<1x32xf32, #tpu.memory_space<vmem>>, vector<1x32xf32>
    %27 = vector.broadcast %26 : vector<1x32xf32> to vector<8x32xf32>
    %28 = arith.addf %25, %27 : vector<8x32xf32>
    %c0_15 = arith.constant 0 : index
    %c0_16 = arith.constant 0 : index
    %29 = vector.load %arg7[%c0_15, %c0_16] : memref<32x32xf32, #tpu.memory_space<vmem>>, vector<32x32xf32>
    %cst_17 = arith.constant dense<0.000000e+00> : vector<8x32xf32>
    %30 = tpu.matmul %23, %29, %cst_17 {dimension_numbers = #tpu.dot_dimension_numbers<[1], [0], [0], [1], [0, 0, 1, 1], [], []>} : vector<8x32xf32>, vector<32x32xf32>, vector<8x32xf32> -> vector<8x32xf32>
    %c0_18 = arith.constant 0 : index
    %c0_19 = arith.constant 0 : index
    %31 = vector.load %arg8[%c0_18, %c0_19] : memref<1x32xf32, #tpu.memory_space<vmem>>, vector<1x32xf32>
    %32 = vector.broadcast %31 : vector<1x32xf32> to vector<8x32xf32>
    %33 = arith.addf %30, %32 : vector<8x32xf32>
    %c0_20 = arith.constant 0 : index
    %c0_21 = arith.constant 0 : index
    %34 = vector.load %arg9[%c0_20, %c0_21] : memref<32x32xf32, #tpu.memory_space<vmem>>, vector<32x32xf32>
    %cst_22 = arith.constant dense<0.000000e+00> : vector<8x32xf32>
    %35 = tpu.matmul %23, %34, %cst_22 {dimension_numbers = #tpu.dot_dimension_numbers<[1], [0], [0], [1], [0, 0, 1, 1], [], []>} : vector<8x32xf32>, vector<32x32xf32>, vector<8x32xf32> -> vector<8x32xf32>
    %c0_23 = arith.constant 0 : index
    %c0_24 = arith.constant 0 : index
    %36 = vector.load %arg10[%c0_23, %c0_24] : memref<1x32xf32, #tpu.memory_space<vmem>>, vector<1x32xf32>
    %37 = vector.broadcast %36 : vector<1x32xf32> to vector<8x32xf32>
    %38 = arith.addf %35, %37 : vector<8x32xf32>
    %cst_25 = arith.constant 0.353553385 : f32
    %39 = vector.broadcast %cst_25 : f32 to vector<8x32xf32>
    %40 = arith.mulf %28, %39 : vector<8x32xf32>
    %41 = vector.shape_cast %40 : vector<8x32xf32> to vector<8x4x8xf32>
    %42 = tpu.transpose %41, [1, 0, 2] : vector<8x4x8xf32> -> vector<4x8x8xf32>
    %c0_26 = arith.constant 0 : index
    %c0_27 = arith.constant 0 : index
    %c0_28 = arith.constant 0 : index
    %c0_29 = arith.constant 0 : index
    %43 = vector.load %arg11[%c0_26, %c0_27, %c0_28, %c0_29] : memref<1x4x8x8xf32, #tpu.memory_space<vmem>>, vector<1x4x8x8xf32>
    %44 = vector.shape_cast %43 : vector<1x4x8x8xf32> to vector<4x8x8xf32>
    %45 = vector.shape_cast %42 : vector<4x8x8xf32> to vector<1x4x8x8xf32>
    tpu.vector_store %arg11[%c0_26, %c0_27, %c0_28, %c0_29], %45 {strides = array<i32>} : memref<1x4x8x8xf32, #tpu.memory_space<vmem>>, vector<1x4x8x8xf32>,
    %46 = vector.shape_cast %33 : vector<8x32xf32> to vector<8x4x8xf32>
    %47 = tpu.transpose %46, [1, 0, 2] : vector<8x4x8xf32> -> vector<4x8x8xf32>
    %c0_30 = arith.constant 0 : index
    %c0_31 = arith.constant 0 : index
    %c0_32 = arith.constant 0 : index
    %c0_33 = arith.constant 0 : index
    %48 = vector.load %arg12[%c0_30, %c0_31, %c0_32, %c0_33] : memref<1x4x8x8xf32, #tpu.memory_space<vmem>>, vector<1x4x8x8xf32>
    %49 = vector.shape_cast %48 : vector<1x4x8x8xf32> to vector<4x8x8xf32>
    %50 = vector.shape_cast %47 : vector<4x8x8xf32> to vector<1x4x8x8xf32>
    tpu.vector_store %arg12[%c0_30, %c0_31, %c0_32, %c0_33], %50 {strides = array<i32>} : memref<1x4x8x8xf32, #tpu.memory_space<vmem>>, vector<1x4x8x8xf32>,
    %51 = vector.shape_cast %38 : vector<8x32xf32> to vector<8x4x8xf32>
    %52 = tpu.transpose %51, [1, 0, 2] : vector<8x4x8xf32> -> vector<4x8x8xf32>
    %c0_34 = arith.constant 0 : index
    %c0_35 = arith.constant 0 : index
    %c0_36 = arith.constant 0 : index
    %c0_37 = arith.constant 0 : index
    %53 = vector.load %arg13[%c0_34, %c0_35, %c0_36, %c0_37] : memref<1x4x8x8xf32, #tpu.memory_space<vmem>>, vector<1x4x8x8xf32>
    %54 = vector.shape_cast %53 : vector<1x4x8x8xf32> to vector<4x8x8xf32>
    %55 = vector.shape_cast %52 : vector<4x8x8xf32> to vector<1x4x8x8xf32>
    tpu.vector_store %arg13[%c0_34, %c0_35, %c0_36, %c0_37], %55 {strides = array<i32>} : memref<1x4x8x8xf32, #tpu.memory_space<vmem>>, vector<1x4x8x8xf32>,
    return
  }
  func.func @transform_0(%arg0: i32, %arg1: i32) -> (i32, i32, i32) {
    %c0_i32 = arith.constant 0 : i32
    %c0_i32_0 = arith.constant 0 : i32
    return %arg0, %arg1, %c0_i32 : i32, i32, i32
  }
  func.func @transform_1(%arg0: i32, %arg1: i32) -> (i32, i32) {
    %c0_i32 = arith.constant 0 : i32
    %c0_i32_0 = arith.constant 0 : i32
    %c0_i32_1 = arith.constant 0 : i32
    return %c0_i32, %c0_i32_0 : i32, i32
  }
  func.func @transform_2(%arg0: i32, %arg1: i32) -> (i32, i32) {
    %c0_i32 = arith.constant 0 : i32
    %c0_i32_0 = arith.constant 0 : i32
    %c0_i32_1 = arith.constant 0 : i32
    return %c0_i32, %c0_i32_0 : i32, i32
  }
  func.func @transform_3(%arg0: i32, %arg1: i32) -> (i32, i32) {
    %c0_i32 = arith.constant 0 : i32
    %c0_i32_0 = arith.constant 0 : i32
    %c0_i32_1 = arith.constant 0 : i32
    return %c0_i32, %c0_i32_0 : i32, i32
  }
  func.func @transform_4(%arg0: i32, %arg1: i32) -> (i32, i32) {
    %c0_i32 = arith.constant 0 : i32
    %c0_i32_0 = arith.constant 0 : i32
    %c0_i32_1 = arith.constant 0 : i32
    return %c0_i32, %c0_i32_0 : i32, i32
  }
  func.func @transform_5(%arg0: i32, %arg1: i32) -> (i32, i32) {
    %c0_i32 = arith.constant 0 : i32
    %c0_i32_0 = arith.constant 0 : i32
    %c0_i32_1 = arith.constant 0 : i32
    return %c0_i32, %c0_i32_0 : i32, i32
  }
  func.func @transform_6(%arg0: i32, %arg1: i32) -> (i32, i32) {
    %c0_i32 = arith.constant 0 : i32
    %c0_i32_0 = arith.constant 0 : i32
    %c0_i32_1 = arith.constant 0 : i32
    return %c0_i32, %c0_i32_0 : i32, i32
  }
  func.func @transform_7(%arg0: i32, %arg1: i32) -> (i32, i32) {
    %c0_i32 = arith.constant 0 : i32
    %c0_i32_0 = arith.constant 0 : i32
    %c0_i32_1 = arith.constant 0 : i32
    return %c0_i32, %c0_i32_0 : i32, i32
  }
  func.func @transform_8(%arg0: i32, %arg1: i32) -> (i32, i32) {
    %c0_i32 = arith.constant 0 : i32
    %c0_i32_0 = arith.constant 0 : i32
    %c0_i32_1 = arith.constant 0 : i32
    return %c0_i32, %c0_i32_0 : i32, i32
  }
  func.func @transform_9(%arg0: i32, %arg1: i32) -> (i32, i32, i32, i32) {
    %c0_i32 = arith.constant 0 : i32
    %c0_i32_0 = arith.constant 0 : i32
    %c0_i32_1 = arith.constant 0 : i32
    return %arg0, %c0_i32, %arg1, %c0_i32_0 : i32, i32, i32, i32
  }
  func.func @transform_10(%arg0: i32, %arg1: i32) -> (i32, i32, i32, i32) {
    %c0_i32 = arith.constant 0 : i32
    %c0_i32_0 = arith.constant 0 : i32
    %c0_i32_1 = arith.constant 0 : i32
    return %arg0, %c0_i32, %arg1, %c0_i32_0 : i32, i32, i32, i32
  }
  func.func @transform_11(%arg0: i32, %arg1: i32) -> (i32, i32, i32, i32) {
    %c0_i32 = arith.constant 0 : i32
    %c0_i32_0 = arith.constant 0 : i32
    %c0_i32_1 = arith.constant 0 : i32
    return %arg0, %c0_i32, %arg1, %c0_i32_0 : i32, i32, i32, i32
  }
}

</mosaic_0001>

<llo_original>
// kernel: tpu_custom_call.1
$region0: #{tpu_custom_call.1}
  #allocation0 [shape = 'u32[]', space=smem, size = 0x4, offset = 0x4, fixed_abs, tag = 'smem constant byte address 0x4 - core index']
  #allocation1 [shape = 'u32[144,128]{1,0:T(1,128)}', space=vmem, size = 0x12000, scoped, tag = 'internal scratch']
  %s0 = inlined_call_operand.hbm [shape: f32[2,8,32], index: 0, kind: input, shape index: {}]
  %s1 = inlined_call_operand.vmem [shape: f32[1,32], index: 1, kind: input, shape index: {}]
  %s2 = inlined_call_operand.vmem [shape: f32[1,32], index: 2, kind: input, shape index: {}]
  %s3 = inlined_call_operand.hbm [shape: f32[32,32], index: 3, kind: input, shape index: {}]
  %s4 = inlined_call_operand.vmem [shape: f32[1,32], index: 4, kind: input, shape index: {}]
  %s5 = inlined_call_operand.hbm [shape: f32[32,32], index: 5, kind: input, shape index: {}]
  %s6 = inlined_call_operand.vmem [shape: f32[1,32], index: 6, kind: input, shape index: {}]
  %s7 = inlined_call_operand.hbm [shape: f32[32,32], index: 7, kind: input, shape index: {}]
  %s8 = inlined_call_operand.vmem [shape: f32[1,32], index: 8, kind: input, shape index: {}]
  %s9 = inlined_call_operand.hbm [shape: f32[2,4,8,8], index: 9, kind: output, shape index: {0}]
  %s10 = inlined_call_operand.hbm [shape: f32[2,4,8,8], index: 10, kind: output, shape index: {1}]
  %s11 = inlined_call_operand.hbm [shape: f32[2,4,8,8], index: 11, kind: output, shape index: {2}]
  %12 = xla_tuple %s9, %s10, %s11
  %s13 = sld [smem:[#allocation0]]
  $region101: #{tpu_custom_call.1} parent=0
    _
  %s15 = ssub.s32 1, %s13
  %s16 = scalar_select 0, %s15, %s13
  $region1: #{tpu_custom_call.1} parent=0
    #allocation2 [shape = 'u8[8192]{0}', space=vmem, size = 0x2000, scoped, tag = 'input window, operand 0']
    #allocation3 [shape = 's32[2]{0}', space=sflag, size = 0x8, scoped, tag = 'scoped memory for tpu_custom_call.1']
    #allocation4 [shape = 's32[2]{0}', space=sflag, size = 0x8, scoped, tag = 'scoped memory for tpu_custom_call.1']
    #allocation5 [shape = 'u8[16384]{0}', space=vmem, size = 0x4000, scoped, tag = 'input window, operand 3, single buffered']
    #allocation6 [shape = 's32[1]{0}', space=sflag, size = 0x4, scoped, tag = 'scoped memory for tpu_custom_call.1']
    #allocation7 [shape = 'u8[16384]{0}', space=vmem, size = 0x4000, scoped, tag = 'input window, operand 5, single buffered']
    #allocation8 [shape = 'u8[16384]{0}', space=vmem, size = 0x4000, scoped, tag = 'input window, operand 7, single buffered']
    #allocation9 [shape = 's32[1]{0}', space=sflag, size = 0x4, scoped, tag = 'scoped memory for tpu_custom_call.1']
    #allocation10 [shape = 'u8[32768]{0}', space=vmem, size = 0x8000, scoped, tag = 'output window, operand 0']
    #allocation11 [shape = 'u8[32768]{0}', space=vmem, size = 0x8000, scoped, tag = 'output window, operand 1']
    #allocation12 [shape = 's32[2]{0}', space=sflag, size = 0x8, scoped, tag = 'scoped memory for tpu_custom_call.1']
    #allocation13 [shape = 'u8[32768]{0}', space=vmem, size = 0x8000, scoped, tag = 'output window, operand 2']
    %17 = vsyncpa [#allocation3], 0
    %s18 = scalar_lea.sflag [#allocation3], 1
    %19 = vsyncpa %s18, 0
    %20 = vsyncpa [#allocation6], 0
    %21 = vsyncpa [#allocation9], 0
    %22 = vsyncpa [#allocation4], 0
    %s23 = scalar_lea.sflag [#allocation4], 1
    %24 = vsyncpa %s23, 0
    %25 = vsyncpa [#allocation12], 0
    %s26 = scalar_lea.sflag [#allocation12], 1
    %27 = vsyncpa %s26, 0
    loop: start=0, step=1, limit=4
    $region2: #{tpu_custom_call.1} parent=1 // loop_pre_header
      _
    $region3: #{tpu_custom_call.1} parent=1 // loop_header
      %s29 = sphi 0, %s33
      %p30 = scmp.ge.s32.totalorder %s29, 4
      %s36 = sphi 0, %s48
      %s37 = sphi 0, %s44
      %s38 = sphi 0, %s36
      %s39 = sphi 0, %s37
      %s40 = sphi 0, %s38
      %s41 = sphi 0, %s39
      %s53 = sphi 0, %s55
      %s56 = sphi 0, %s53
      %s57 = sphi 0, %s56
      %s73 = sphi 0, %s57
      %s77 = sphi 0, %s77
      %s79 = sphi 0, %s77
      %s80 = sphi 0, %s79
      %s94 = sphi 0, %s80
      %s98 = sphi 0, %s98
      %s100 = sphi 0, %s98
      %s101 = sphi 0, %s100
      %s115 = sphi 0, %s101
      %s119 = sphi 0, %s119
      %s121 = sphi 0, %s119
      %s122 = sphi 0, %s121
      %s136 = sphi 0, %s122
      %s140 = sphi 0, %s140
      %s142 = sphi 0, %s140
      %s143 = sphi 0, %s142
      %s157 = sphi 0, %s143
      %s161 = sphi 0, %s161
      %s163 = sphi 0, %s161
      %s164 = sphi 0, %s163
      %s178 = sphi 0, %s164
      %s182 = sphi 0, %s182
      %s184 = sphi 0, %s182
      %s185 = sphi 0, %s184
      %s199 = sphi 0, %s185
      %s203 = sphi 0, %s203
      %s205 = sphi 0, %s203
      %s206 = sphi 0, %s205
      %s220 = sphi 0, %s206
      %s224 = sphi 0, %s224
      %s226 = sphi 0, %s224
      %s227 = sphi 0, %s226
      %s241 = sphi 0, %s227
      %s249 = sphi 0, %s251
      %s252 = sphi 0, %s249
      %s253 = sphi 0, %s252
      %s269 = sphi 0, %s253
      %s277 = sphi 0, %s279
      %s280 = sphi 0, %s277
      %s281 = sphi 0, %s280
      %s297 = sphi 0, %s281
      %s305 = sphi 0, %s307
      %s308 = sphi 0, %s305
      %s309 = sphi 0, %s308
      %s325 = sphi 0, %s309
    $region4: #{tpu_custom_call.1} parent=1 // loop_header_branch
      %32 = sbr.rel (%p30) target = $region8
    $region5: #{tpu_custom_call.1} parent=1 // loop_body
      %s34 = ssub.s32 %s29, 1
      %s35 = ssub.s32 %s29, 2
      %s42 = sadd.s32 1, %s37
      %p43 = scmp.ge.s32.totalorder %s42, 1
      %s44 = scalar_select %p43, 0, %s42
      %s45 = sadd.s32 1, %s36
      %s46 = scalar_select %p43, %s45, %s36
      %p47 = scmp.ge.s32.totalorder %s46, 2
      %s48 = scalar_select %p47, 0, %s46
      %s49 = ssub.s32 %s36, %s48
      %s50 = ssub.s32 %s37, %s44
      %s51 = sor.u32 %s49, %s50
      %p52 = scmp.eq.s32.totalorder %s51, 0
      %s54 = sadd.s32 %s53, 1
      %s55 = scalar_select %p52, %s53, %s54
      %p58 = pneg %p52
      %p59 = scmp.eq.s32.totalorder %s29, 1
      %p60 = por %p58, %p59
      %p61 = scmp.ne.s32.totalorder %s53, %s56
      %p62 = scmp.eq.s32.totalorder %s29, 0
      %p63 = por %p61, %p62
      %p64 = scmp.ne.s32.totalorder %s53, %s56
      %p65 = scmp.eq.s32.totalorder %s34, 1
      %p66 = por %p64, %p65
      %p67 = scmp.ne.s32.totalorder %s56, %s57
      %p68 = scmp.eq.s32.totalorder %s34, 0
      %p69 = por %p67, %p68
      %p70 = scmp.ne.s32.totalorder %s56, %s57
      %p71 = scmp.eq.s32.totalorder %s35, 1
      %p72 = por %p70, %p71
      %p74 = scmp.ne.s32.totalorder %s57, %s73
      %p75 = scmp.eq.s32.totalorder %s35, 0
      %p76 = por %p74, %p75
      %s78 = sadd.s32 %s77, 1
      %p81 = scmp.eq.s32.totalorder %s29, 1
      %p82 = scmp.ne.s32.totalorder %s77, %s79
      %p83 = scmp.eq.s32.totalorder %s29, 0
      %p84 = por %p82, %p83
      %p85 = scmp.ne.s32.totalorder %s77, %s79
      %p86 = scmp.eq.s32.totalorder %s34, 1
      %p87 = por %p85, %p86
      %p88 = scmp.ne.s32.totalorder %s79, %s80
      %p89 = scmp.eq.s32.totalorder %s34, 0
      %p90 = por %p88, %p89
      %p91 = scmp.ne.s32.totalorder %s79, %s80
      %p92 = scmp.eq.s32.totalorder %s35, 1
      %p93 = por %p91, %p92
      %p95 = scmp.ne.s32.totalorder %s80, %s94
      %p96 = scmp.eq.s32.totalorder %s35, 0
      %p97 = por %p95, %p96
      %s99 = sadd.s32 %s98, 1
      %p102 = scmp.eq.s32.totalorder %s29, 1
      %p103 = scmp.ne.s32.totalorder %s98, %s100
      %p104 = scmp.eq.s32.totalorder %s29, 0
      %p105 = por %p103, %p104
      %p106 = scmp.ne.s32.totalorder %s98, %s100
      %p107 = scmp.eq.s32.totalorder %s34, 1
      %p108 = por %p106, %p107
      %p109 = scmp.ne.s32.totalorder %s100, %s101
      %p110 = scmp.eq.s32.totalorder %s34, 0
      %p111 = por %p109, %p110
      %p112 = scmp.ne.s32.totalorder %s100, %s101
      %p113 = scmp.eq.s32.totalorder %s35, 1
      %p114 = por %p112, %p113
      %p116 = scmp.ne.s32.totalorder %s101, %s115
      %p117 = scmp.eq.s32.totalorder %s35, 0
      %p118 = por %p116, %p117
      %s120 = sadd.s32 %s119, 1
      %p123 = scmp.eq.s32.totalorder %s29, 1
      %p124 = scmp.ne.s32.totalorder %s119, %s121
      %p125 = scmp.eq.s32.totalorder %s29, 0
      %p126 = por %p124, %p125
      %p127 = scmp.ne.s32.totalorder %s119, %s121
      %p128 = scmp.eq.s32.totalorder %s34, 1
      %p129 = por %p127, %p128
      %p130 = scmp.ne.s32.totalorder %s121, %s122
      %p131 = scmp.eq.s32.totalorder %s34, 0
      %p132 = por %p130, %p131
      %p133 = scmp.ne.s32.totalorder %s121, %s122
      %p134 = scmp.eq.s32.totalorder %s35, 1
      %p135 = por %p133, %p134
      %p137 = scmp.ne.s32.totalorder %s122, %s136
      %p138 = scmp.eq.s32.totalorder %s35, 0
      %p139 = por %p137, %p138
      %s141 = sadd.s32 %s140, 1
      %p144 = scmp.eq.s32.totalorder %s29, 1
      %p145 = scmp.ne.s32.totalorder %s140, %s142
      %p146 = scmp.eq.s32.totalorder %s29, 0
      %p147 = por %p145, %p146
      %p148 = scmp.ne.s32.totalorder %s140, %s142
      %p149 = scmp.eq.s32.totalorder %s34, 1
      %p150 = por %p148, %p149
      %p151 = scmp.ne.s32.totalorder %s142, %s143
      %p152 = scmp.eq.s32.totalorder %s34, 0
      %p153 = por %p151, %p152
      %p154 = scmp.ne.s32.totalorder %s142, %s143
      %p155 = scmp.eq.s32.totalorder %s35, 1
      %p156 = por %p154, %p155
      %p158 = scmp.ne.s32.totalorder %s143, %s157
      %p159 = scmp.eq.s32.totalorder %s35, 0
      %p160 = por %p158, %p159
      %s162 = sadd.s32 %s161, 1
      %p165 = scmp.eq.s32.totalorder %s29, 1
      %p166 = scmp.ne.s32.totalorder %s161, %s163
      %p167 = scmp.eq.s32.totalorder %s29, 0
      %p168 = por %p166, %p167
      %p169 = scmp.ne.s32.totalorder %s161, %s163
      %p170 = scmp.eq.s32.totalorder %s34, 1
      %p171 = por %p169, %p170
      %p172 = scmp.ne.s32.totalorder %s163, %s164
      %p173 = scmp.eq.s32.totalorder %s34, 0
      %p174 = por %p172, %p173
      %p175 = scmp.ne.s32.totalorder %s163, %s164
      %p176 = scmp.eq.s32.totalorder %s35, 1
      %p177 = por %p175, %p176
      %p179 = scmp.ne.s32.totalorder %s164, %s178
      %p180 = scmp.eq.s32.totalorder %s35, 0
      %p181 = por %p179, %p180
      %s183 = sadd.s32 %s182, 1
      %p186 = scmp.eq.s32.totalorder %s29, 1
      %p187 = scmp.ne.s32.totalorder %s182, %s184
      %p188 = scmp.eq.s32.totalorder %s29, 0
      %p189 = por %p187, %p188
      %p190 = scmp.ne.s32.totalorder %s182, %s184
      %p191 = scmp.eq.s32.totalorder %s34, 1
      %p192 = por %p190, %p191
      %p193 = scmp.ne.s32.totalorder %s184, %s185
      %p194 = scmp.eq.s32.totalorder %s34, 0
      %p195 = por %p193, %p194
      %p196 = scmp.ne.s32.totalorder %s184, %s185
      %p197 = scmp.eq.s32.totalorder %s35, 1
      %p198 = por %p196, %p197
      %p200 = scmp.ne.s32.totalorder %s185, %s199
      %p201 = scmp.eq.s32.totalorder %s35, 0
      %p202 = por %p200, %p201
      %s204 = sadd.s32 %s203, 1
      %p207 = scmp.eq.s32.totalorder %s29, 1
      %p208 = scmp.ne.s32.totalorder %s203, %s205
      %p209 = scmp.eq.s32.totalorder %s29, 0
      %p210 = por %p208, %p209
      %p211 = scmp.ne.s32.totalorder %s203, %s205
      %p212 = scmp.eq.s32.totalorder %s34, 1
      %p213 = por %p211, %p212
      %p214 = scmp.ne.s32.totalorder %s205, %s206
      %p215 = scmp.eq.s32.totalorder %s34, 0
      %p216 = por %p214, %p215
      %p217 = scmp.ne.s32.totalorder %s205, %s206
      %p218 = scmp.eq.s32.totalorder %s35, 1
      %p219 = por %p217, %p218
      %p221 = scmp.ne.s32.totalorder %s206, %s220
      %p222 = scmp.eq.s32.totalorder %s35, 0
      %p223 = por %p221, %p222
      %s225 = sadd.s32 %s224, 1
      %p228 = scmp.eq.s32.totalorder %s29, 1
      %p229 = scmp.ne.s32.totalorder %s224, %s226
      %p230 = scmp.eq.s32.totalorder %s29, 0
      %p231 = por %p229, %p230
      %p232 = scmp.ne.s32.totalorder %s224, %s226
      %p233 = scmp.eq.s32.totalorder %s34, 1
      %p234 = por %p232, %p233
      %p235 = scmp.ne.s32.totalorder %s226, %s227
      %p236 = scmp.eq.s32.totalorder %s34, 0
      %p237 = por %p235, %p236
      %p238 = scmp.ne.s32.totalorder %s226, %s227
      %p239 = scmp.eq.s32.totalorder %s35, 1
      %p240 = por %p238, %p239
      %p242 = scmp.ne.s32.totalorder %s227, %s241
      %p243 = scmp.eq.s32.totalorder %s35, 0
      %p244 = por %p242, %p243
      %s245 = ssub.s32 %s36, %s48
      %s246 = ssub.s32 %s37, %s44
      %s247 = sor.u32 %s245, %s246
      %p248 = scmp.eq.s32.totalorder %s247, 0
      %s250 = sadd.s32 %s249, 1
      %s251 = scalar_select %p248, %s249, %s250
      %p254 = pneg %p248
      %p255 = scmp.eq.s32.totalorder %s29, 1
      %p256 = por %p254, %p255
      %p257 = scmp.ne.s32.totalorder %s249, %s252
      %p258 = scmp.eq.s32.totalorder %s29, 0
      %p259 = por %p257, %p258
      %p260 = scmp.ne.s32.totalorder %s249, %s252
      %p261 = scmp.eq.s32.totalorder %s34, 1
      %p262 = por %p260, %p261
      %p263 = scmp.ne.s32.totalorder %s252, %s253
      %p264 = scmp.eq.s32.totalorder %s34, 0
      %p265 = por %p263, %p264
      %p266 = scmp.ne.s32.totalorder %s252, %s253
      %p267 = scmp.eq.s32.totalorder %s35, 1
      %p268 = por %p266, %p267
      %p270 = scmp.ne.s32.totalorder %s253, %s269
      %p271 = scmp.eq.s32.totalorder %s35, 0
      %p272 = por %p270, %p271
      %s273 = ssub.s32 %s36, %s48
      %s274 = ssub.s32 %s37, %s44
      %s275 = sor.u32 %s273, %s274
      %p276 = scmp.eq.s32.totalorder %s275, 0
      %s278 = sadd.s32 %s277, 1
      %s279 = scalar_select %p276, %s277, %s278
      %p282 = pneg %p276
      %p283 = scmp.eq.s32.totalorder %s29, 1
      %p284 = por %p282, %p283
      %p285 = scmp.ne.s32.totalorder %s277, %s280
      %p286 = scmp.eq.s32.totalorder %s29, 0
      %p287 = por %p285, %p286
      %p288 = scmp.ne.s32.totalorder %s277, %s280
      %p289 = scmp.eq.s32.totalorder %s34, 1
      %p290 = por %p288, %p289
      %p291 = scmp.ne.s32.totalorder %s280, %s281
      %p292 = scmp.eq.s32.totalorder %s34, 0
      %p293 = por %p291, %p292
      %p294 = scmp.ne.s32.totalorder %s280, %s281
      %p295 = scmp.eq.s32.totalorder %s35, 1
      %p296 = por %p294, %p295
      %p298 = scmp.ne.s32.totalorder %s281, %s297
      %p299 = scmp.eq.s32.totalorder %s35, 0
      %p300 = por %p298, %p299
      %s301 = ssub.s32 %s36, %s48
      %s302 = ssub.s32 %s37, %s44
      %s303 = sor.u32 %s301, %s302
      %p304 = scmp.eq.s32.totalorder %s303, 0
      %s306 = sadd.s32 %s305, 1
      %s307 = scalar_select %p304, %s305, %s306
      %p310 = pneg %p304
      %p311 = scmp.eq.s32.totalorder %s29, 1
      %p312 = por %p310, %p311
      %p313 = scmp.ne.s32.totalorder %s305, %s308
      %p314 = scmp.eq.s32.totalorder %s29, 0
      %p315 = por %p313, %p314
      %p316 = scmp.ne.s32.totalorder %s305, %s308
      %p317 = scmp.eq.s32.totalorder %s34, 1
      %p318 = por %p316, %p317
      %p319 = scmp.ne.s32.totalorder %s308, %s309
      %p320 = scmp.eq.s32.totalorder %s34, 0
      %p321 = por %p319, %p320
      %p322 = scmp.ne.s32.totalorder %s308, %s309
      %p323 = scmp.eq.s32.totalorder %s35, 1
      %p324 = por %p322, %p323
      %p326 = scmp.ne.s32.totalorder %s309, %s325
      %p327 = scmp.eq.s32.totalorder %s35, 0
      %p328 = por %p326, %p327
      %p329 = scmp.le.s32.totalorder 1, %s29
      %p330 = scmp.lt.s32.totalorder %s29, 3
      %p331 = pnand %p329, %p330
      %p332 = pneg %p331
      // Predicated region
      $region9: #{tpu_custom_call.1} parent=5 // pred_check
        _
      $region10: #{tpu_custom_call.1} parent=5 // pred_check_branch
        %334 = sbr.rel (%p331) target = $region12
      $region11: #{tpu_custom_call.1} parent=5 // pred_region
        %s335 = ssub.s32 %s29, 1
        // Predicated region
        $region13: #{tpu_custom_call.1} parent=11 // pred_check
          %p336 = pneg %p90
        $region14: #{tpu_custom_call.1} parent=11 // pred_check_branch
          %338 = sbr.rel (%p336) target = $region16
        $region15: #{tpu_custom_call.1} parent=11 // pred_region
          _
        $region16: #{tpu_custom_call.1} parent=11 // pred_fallthru
          _
        // Predicated region
        $region17: #{tpu_custom_call.1} parent=11 // pred_check
          %p339 = pneg %p111
        $region18: #{tpu_custom_call.1} parent=11 // pred_check_branch
          %341 = sbr.rel (%p339) target = $region20
        $region19: #{tpu_custom_call.1} parent=11 // pred_region
          _
        $region20: #{tpu_custom_call.1} parent=11 // pred_fallthru
          _
        // Predicated region
        $region21: #{tpu_custom_call.1} parent=11 // pred_check
          %p342 = pneg %p132
        $region22: #{tpu_custom_call.1} parent=11 // pred_check_branch
          %344 = sbr.rel (%p342) target = $region24
        $region23: #{tpu_custom_call.1} parent=11 // pred_region
          %s346 = ssub.s32 512, 512
          %347 = vsyncadd [#allocation6], %s346
          %s348 = sshll.u32 [#allocation5], 4
          %s349 = int_to_ptr.vmem [resolvable:$true] %s348
          %354 = dma.hbm_to_vmem [thread:$0]  %s3, 512, %s349, [#allocation6], 128, 128, 8
        $region24: #{tpu_custom_call.1} parent=11 // pred_fallthru
          _
        // Predicated region
        $region25: #{tpu_custom_call.1} parent=11 // pred_check
          %p355 = pneg %p153
        $region26: #{tpu_custom_call.1} parent=11 // pred_check_branch
          %357 = sbr.rel (%p355) target = $region28
        $region27: #{tpu_custom_call.1} parent=11 // pred_region
          _
        $region28: #{tpu_custom_call.1} parent=11 // pred_fallthru
          _
        // Predicated region
        $region29: #{tpu_custom_call.1} parent=11 // pred_check
          %p358 = pneg %p174
        $region30: #{tpu_custom_call.1} parent=11 // pred_check_branch
          %360 = sbr.rel (%p358) target = $region32
        $region31: #{tpu_custom_call.1} parent=11 // pred_region
          %s362 = ssub.s32 512, 512
          %363 = vsyncadd [#allocation6], %s362
          %s364 = sshll.u32 [#allocation7], 4
          %s365 = int_to_ptr.vmem [resolvable:$true] %s364
          %370 = dma.hbm_to_vmem [thread:$0]  %s5, 512, %s365, [#allocation6], 128, 128, 8
        $region32: #{tpu_custom_call.1} parent=11 // pred_fallthru
          _
        // Predicated region
        $region33: #{tpu_custom_call.1} parent=11 // pred_check
          %p371 = pneg %p195
        $region34: #{tpu_custom_call.1} parent=11 // pred_check_branch
          %373 = sbr.rel (%p371) target = $region36
        $region35: #{tpu_custom_call.1} parent=11 // pred_region
          _
        $region36: #{tpu_custom_call.1} parent=11 // pred_fallthru
          _
        // Predicated region
        $region37: #{tpu_custom_call.1} parent=11 // pred_check
          %p374 = pneg %p216
        $region38: #{tpu_custom_call.1} parent=11 // pred_check_branch
          %376 = sbr.rel (%p374) target = $region40
        $region39: #{tpu_custom_call.1} parent=11 // pred_region
          %s378 = ssub.s32 512, 512
          %379 = vsyncadd [#allocation9], %s378
          %s380 = sshll.u32 [#allocation8], 4
          %s381 = int_to_ptr.vmem [resolvable:$true] %s380
          %386 = dma.hbm_to_vmem [thread:$0]  %s7, 512, %s381, [#allocation9], 128, 128, 8
        $region40: #{tpu_custom_call.1} parent=11 // pred_fallthru
          _
        // Predicated region
        $region41: #{tpu_custom_call.1} parent=11 // pred_check
          %p387 = pneg %p237
        $region42: #{tpu_custom_call.1} parent=11 // pred_check_branch
          %389 = sbr.rel (%p387) target = $region44
        $region43: #{tpu_custom_call.1} parent=11 // pred_region
          _
        $region44: #{tpu_custom_call.1} parent=11 // pred_fallthru
          _
      $region12: #{tpu_custom_call.1} parent=5 // pred_fallthru
        _
      %p390 = scmp.lt.s32.totalorder %s29, 2
      // Predicated region
      $region45: #{tpu_custom_call.1} parent=5 // pred_check
        %p391 = pneg %p390
      $region46: #{tpu_custom_call.1} parent=5 // pred_check_branch
        %393 = sbr.rel (%p391) target = $region48
      $region47: #{tpu_custom_call.1} parent=5 // pred_region
        // Predicated region
        $region49: #{tpu_custom_call.1} parent=47 // pred_check
          %p394 = pneg %p63
        $region50: #{tpu_custom_call.1} parent=47 // pred_check_branch
          %396 = sbr.rel (%p394) target = $region52
        $region51: #{tpu_custom_call.1} parent=47 // pred_region
          %s397 = sand.u32 %s53, 1
          %s398 = scalar_lea.sflag [#allocation3], %s397
          %s399 = sand.u32 %s53, 1
          %s400 = smul.addr %s399, 8
          %s401 = scalar_lea.vmem [#allocation2], %s400
          %s403 = ssub.s32 128, 128
          %404 = vsyncadd %s398, %s403
          %s405 = sadd.s32 %s37, %s36
          %s406 = smul.addr %s405, 128
          %s407 = scalar_lea.hbm %s0, %s406
          %s409 = sshll.u32 %s401, 4
          %s410 = int_to_ptr.vmem [resolvable:$true] %s409
          %412 = dma.hbm_to_vmem [thread:$0]  %s407, 128, %s410, %s398
        $region52: #{tpu_custom_call.1} parent=47 // pred_fallthru
          _
      $region48: #{tpu_custom_call.1} parent=5 // pred_fallthru
        _
      %p413 = scmp.le.s32.totalorder 1, %s29
      %p414 = scmp.lt.s32.totalorder %s29, 3
      %p415 = pnand %p413, %p414
      %p416 = pneg %p415
      // Predicated region
      $region53: #{tpu_custom_call.1} parent=5 // pred_check
        _
      $region54: #{tpu_custom_call.1} parent=5 // pred_check_branch
        %418 = sbr.rel (%p415) target = $region56
      $region55: #{tpu_custom_call.1} parent=5 // pred_region
        %s419 = ssub.s32 %s29, 1
        %s420 = sand.u32 %s56, 1
        %s421 = scalar_lea.sflag [#allocation3], %s420
        %s422 = sand.u32 %s56, 1
        %s423 = smul.addr %s422, 8
        %s424 = scalar_lea.vmem [#allocation2], %s423
        // Predicated region
        $region57: #{tpu_custom_call.1} parent=55 // pred_check
          %p425 = pneg %p69
        $region58: #{tpu_custom_call.1} parent=55 // pred_check_branch
          %427 = sbr.rel (%p425) target = $region60
        $region59: #{tpu_custom_call.1} parent=55 // pred_region
          %428 = dma.done %s421, 128
        $region60: #{tpu_custom_call.1} parent=55 // pred_fallthru
          _
        // Predicated region
        $region61: #{tpu_custom_call.1} parent=55 // pred_check
          %p429 = pneg %p132
        $region62: #{tpu_custom_call.1} parent=55 // pred_check_branch
          %431 = sbr.rel (%p429) target = $region64
        $region63: #{tpu_custom_call.1} parent=55 // pred_region
          %432 = dma.done [#allocation6], 512
        $region64: #{tpu_custom_call.1} parent=55 // pred_fallthru
          _
        // Predicated region
        $region65: #{tpu_custom_call.1} parent=55 // pred_check
          %p433 = pneg %p174
        $region66: #{tpu_custom_call.1} parent=55 // pred_check_branch
          %435 = sbr.rel (%p433) target = $region68
        $region67: #{tpu_custom_call.1} parent=55 // pred_region
          %436 = dma.done [#allocation6], 512
        $region68: #{tpu_custom_call.1} parent=55 // pred_fallthru
          _
        // Predicated region
        $region69: #{tpu_custom_call.1} parent=55 // pred_check
          %p437 = pneg %p216
        $region70: #{tpu_custom_call.1} parent=55 // pred_check_branch
          %439 = sbr.rel (%p437) target = $region72
        $region71: #{tpu_custom_call.1} parent=55 // pred_region
          %440 = dma.done [#allocation9], 512
        $region72: #{tpu_custom_call.1} parent=55 // pred_fallthru
          _
        %s441 = sand.u32 %s56, 1
        %s442 = scalar_lea.sflag [#allocation3], %s441
        %s443 = sand.u32 %s56, 1
        %s444 = smul.addr %s443, 8
        %s445 = scalar_lea.vmem [#allocation2], %s444
        %p446 = pneg %p69
        %p447 = pneg %p66
        %p448 = pneg %p90
        %p449 = pneg %p87
        %p450 = pneg %p111
        %p451 = pneg %p108
        %p452 = pneg %p132
        %p453 = pneg %p129
        %p454 = pneg %p153
        %p455 = pneg %p150
        %p456 = pneg %p174
        %p457 = pneg %p171
        %p458 = pneg %p195
        %p459 = pneg %p192
        %p460 = pneg %p216
        %p461 = pneg %p213
        %p462 = pneg %p237
        %p463 = pneg %p234
        %p464 = pneg %p265
        %p465 = pneg %p262
        %s466 = sand.u32 %s252, 1
        %s467 = scalar_lea.sflag [#allocation4], %s466
        %s468 = sand.u32 %s252, 1
        %s469 = smul.addr %s468, 32
        %s470 = scalar_lea.vmem [#allocation10], %s469
        %p471 = pneg %p293
        %p472 = pneg %p290
        %s473 = sand.u32 %s34, 1
        %s474 = scalar_lea.sflag [#allocation12], %s473
        %s475 = sand.u32 %s280, 1
        %s476 = smul.addr %s475, 32
        %s477 = scalar_lea.vmem [#allocation11], %s476
        %p478 = pneg %p321
        %p479 = pneg %p318
        %s480 = sand.u32 %s34, 1
        %s481 = scalar_lea.sflag [#allocation12], %s480
        %s482 = sand.u32 %s308, 1
        %s483 = smul.addr %s482, 32
        %s484 = scalar_lea.vmem [#allocation13], %s483
        %v485 = vld [vmem:[%s424] sm:$0xff]
        %v486 = vld [vmem:[%s1] sm:$0x1]
        %v487 = vld [vmem:[%s2] sm:$0x1]
        %vm488 = vcmask 261120
        %v489 = vsel %vm488, %v485, 0.0
        %490 = vadd.xlane.f32.xlu0 %v489
        %v491 = vpop.xlane.xlu0 %490
        %v492 = vrcp.pop 32.0
        %v493 = vmul.f32 %v491, %v492
        %v494 = vsub.f32 %v485, %v493
        %v495 = vmul.f32 %v494, %v494
        %v496 = vsel %vm488, %v495, 0.0
        %497 = vadd.xlane.f32.xlu0 %v496
        %v498 = vpop.xlane.xlu0 %497
        %v499 = vmul.f32 %v498, %v492
        %v500 = vadd.f32 %v499, 1e-05
        %v501 = vrsqrt.pop %v500
        %v502 = vmul.f32 %v494, %v501
        %v504 = vlaneseq
        %v505 = vshrl.u32 %v504, 7
        %v506 = vsub.s32 0, %v505
        %v507 = vrot.slane %v486, %v506
        %v509 = vmul.f32 %v502, %v507
        %v511 = vlaneseq
        %v512 = vshrl.u32 %v511, 7
        %v513 = vsub.s32 0, %v512
        %v514 = vrot.slane %v487, %v513
        %v516 = vadd.f32 %v509, %v514
        %v517 = vld [vmem:[#allocation5] sm:$0xff]
        %v518 = vld [vmem:[#allocation5 + $0x8] sm:$0xff]
        %v519 = vld [vmem:[#allocation5 + $0x10] sm:$0xff]
        %v520 = vld [vmem:[#allocation5 + $0x18] sm:$0xff]
        %v521 = vld [vmem:[%s4] sm:$0x1]
        %v523 = vlaneseq
        %v524 = vshrl.u32 %v523, 7
        %v525 = vsub.s32 0, %v524
        %v526 = vrot.slane %v521, %v525
        %v529 = vsel %vm488, %v516, 0
        %531 = vmatprep.subr.mxu0 0.0
        %532 = vmatpush1.msra.mxu0 0.0
        %533 = vmatprep.subr.mxu0 0.0
        %534 = vmatpush1.msra.mxu0 0.0
        %535 = vmatprep.subr.mxu0 0.0
        %536 = vmatpush1.msra.mxu0 0.0
        %537 = vmatprep.subr.mxu0 0.0
        %538 = vmatpush1.msra.mxu0 0.0
        %539 = vmatprep.subr.mxu0 0.0
        %540 = vmatpush1.msra.mxu0 0.0
        %541 = vmatprep.subr.mxu0 0.0
        %542 = vmatpush1.msra.mxu0 0.0
        %543 = vmatprep.subr.mxu0 0.0
        %544 = vmatpush1.msra.mxu0 0.0
        %545 = vmatprep.subr.mxu0 0.0
        %546 = vmatpush1.msra.mxu0 0.0
        %547 = vmatprep.subr.mxu0 0.0
        %548 = vmatpush1.msra.mxu0 0.0
        %549 = vmatprep.subr.mxu0 0.0
        %550 = vmatpush1.msra.mxu0 0.0
        %551 = vmatprep.subr.mxu0 0.0
        %552 = vmatpush1.msra.mxu0 0.0
        %553 = vmatprep.subr.mxu0 0.0
        %554 = vmatpush1.msra.mxu0 0.0
        %555 = vmatprep.subr.mxu0 0.0
        %556 = vmatpush1.msra.mxu0 %v520
        %557 = vmatprep.subr.mxu0 0.0
        %558 = vmatpush1.msra.mxu0 %v519
        %559 = vmatprep.subr.mxu0 0.0
        %560 = vmatpush1.msra.mxu0 %v518
        %561 = vmatprep.subr.mxu0 0.0
        %562 = vmatpush1.msra.mxu0 %v517
        %563 = vmatprep.subr.mxu0 0.0
        %564 = vmatpush2.msra.mxu0 0.0
        %565 = vmatprep.subr.mxu0 0.0
        %566 = vmatpush2.msra.mxu0 0.0
        %567 = vmatprep.subr.mxu0 0.0
        %568 = vmatpush2.msra.mxu0 0.0
        %569 = vmatprep.subr.mxu0 0.0
        %570 = vmatpush2.msra.mxu0 0.0
        %571 = vmatprep.subr.mxu0 0.0
        %572 = vmatpush2.msra.mxu0 0.0
        %573 = vmatprep.subr.mxu0 0.0
        %574 = vmatpush2.msra.mxu0 0.0
        %575 = vmatprep.subr.mxu0 0.0
        %576 = vmatpush2.msra.mxu0 0.0
        %577 = vmatprep.subr.mxu0 0.0
        %578 = vmatpush2.msra.mxu0 0.0
        %579 = vmatprep.subr.mxu0 0.0
        %580 = vmatpush2.msra.mxu0 0.0
        %581 = vmatprep.subr.mxu0 0.0
        %582 = vmatpush2.msra.mxu0 0.0
        %583 = vmatprep.subr.mxu0 0.0
        %584 = vmatpush2.msra.mxu0 0.0
        %585 = vmatprep.subr.mxu0 0.0
        %586 = vmatpush2.msra.mxu0 0.0
        %587 = vmatprep.subr.mxu0 0.0
        %588 = vmatpush2.msra.mxu0 0.0
        %589 = vmatprep.subr.mxu0 0.0
        %590 = vmatpush2.msra.mxu0 0.0
        %591 = vmatprep.subr.mxu0 0.0
        %592 = vmatpush2.msra.mxu0 0.0
        %593 = vmatprep.subr.mxu0 0.0
        %594 = vmatpush2.msra.mxu0 0.0
        %595 = vmatprep.mubr.f32.mxu0 0.0
        %596 = vmatmul.mubr.f32.gmra.mxu0 %v529
        %v597 = vpop.f32.mrf.mxu0
        %v598 = vadd.f32 %v526, %v597
        %v599 = vpop.f32.mrf.mxu0
        %600 = vdwg.mxu0
        %v601 = vld [vmem:[#allocation7] sm:$0xff]
        %v602 = vld [vmem:[#allocation7 + $0x8] sm:$0xff]
        %v603 = vld [vmem:[#allocation7 + $0x10] sm:$0xff]
        %v604 = vld [vmem:[#allocation7 + $0x18] sm:$0xff]
        %v605 = vld [vmem:[%s6] sm:$0x1]
        %v607 = vlaneseq
        %v608 = vshrl.u32 %v607, 7
        %v609 = vsub.s32 0, %v608
        %v610 = vrot.slane %v605, %v609
        %612 = vmatprep.subr.mxu0 0.0
        %613 = vmatpush1.msra.mxu0 0.0
        %614 = vmatprep.subr.mxu0 0.0
        %615 = vmatpush1.msra.mxu0 0.0
        %616 = vmatprep.subr.mxu0 0.0
        %617 = vmatpush1.msra.mxu0 0.0
        %618 = vmatprep.subr.mxu0 0.0
        %619 = vmatpush1.msra.mxu0 0.0
        %620 = vmatprep.subr.mxu0 0.0
        %621 = vmatpush1.msra.mxu0 0.0
        %622 = vmatprep.subr.mxu0 0.0
        %623 = vmatpush1.msra.mxu0 0.0
        %624 = vmatprep.subr.mxu0 0.0
        %625 = vmatpush1.msra.mxu0 0.0
        %626 = vmatprep.subr.mxu0 0.0
        %627 = vmatpush1.msra.mxu0 0.0
        %628 = vmatprep.subr.mxu0 0.0
        %629 = vmatpush1.msra.mxu0 0.0
        %630 = vmatprep.subr.mxu0 0.0
        %631 = vmatpush1.msra.mxu0 0.0
        %632 = vmatprep.subr.mxu0 0.0
        %633 = vmatpush1.msra.mxu0 0.0
        %634 = vmatprep.subr.mxu0 0.0
        %635 = vmatpush1.msra.mxu0 0.0
        %636 = vmatprep.subr.mxu0 0.0
        %637 = vmatpush1.msra.mxu0 %v604
        %638 = vmatprep.subr.mxu0 0.0
        %639 = vmatpush1.msra.mxu0 %v603
        %640 = vmatprep.subr.mxu0 0.0
        %641 = vmatpush1.msra.mxu0 %v602
        %642 = vmatprep.subr.mxu0 0.0
        %643 = vmatpush1.msra.mxu0 %v601
        %644 = vmatprep.subr.mxu0 0.0
        %645 = vmatpush2.msra.mxu0 0.0
        %646 = vmatprep.subr.mxu0 0.0
        %647 = vmatpush2.msra.mxu0 0.0
        %648 = vmatprep.subr.mxu0 0.0
        %649 = vmatpush2.msra.mxu0 0.0
        %650 = vmatprep.subr.mxu0 0.0
        %651 = vmatpush2.msra.mxu0 0.0
        %652 = vmatprep.subr.mxu0 0.0
        %653 = vmatpush2.msra.mxu0 0.0
        %654 = vmatprep.subr.mxu0 0.0
        %655 = vmatpush2.msra.mxu0 0.0
        %656 = vmatprep.subr.mxu0 0.0
        %657 = vmatpush2.msra.mxu0 0.0
        %658 = vmatprep.subr.mxu0 0.0
        %659 = vmatpush2.msra.mxu0 0.0
        %660 = vmatprep.subr.mxu0 0.0
        %661 = vmatpush2.msra.mxu0 0.0
        %662 = vmatprep.subr.mxu0 0.0
        %663 = vmatpush2.msra.mxu0 0.0
        %664 = vmatprep.subr.mxu0 0.0
        %665 = vmatpush2.msra.mxu0 0.0
        %666 = vmatprep.subr.mxu0 0.0
        %667 = vmatpush2.msra.mxu0 0.0
        %668 = vmatprep.subr.mxu0 0.0
        %669 = vmatpush2.msra.mxu0 0.0
        %670 = vmatprep.subr.mxu0 0.0
        %671 = vmatpush2.msra.mxu0 0.0
        %672 = vmatprep.subr.mxu0 0.0
        %673 = vmatpush2.msra.mxu0 0.0
        %674 = vmatprep.subr.mxu0 0.0
        %675 = vmatpush2.msra.mxu0 0.0
        %676 = vmatprep.mubr.f32.mxu0 0.0
        %677 = vmatmul.mubr.f32.gmra.mxu0 %v529
        %v678 = vpop.f32.mrf.mxu0
        %v679 = vadd.f32 %v610, %v678
        %v680 = vpop.f32.mrf.mxu0
        %681 = vdwg.mxu0
        %v682 = vld [vmem:[#allocation8] sm:$0xff]
        %v683 = vld [vmem:[#allocation8 + $0x8] sm:$0xff]
        %v684 = vld [vmem:[#allocation8 + $0x10] sm:$0xff]
        %v685 = vld [vmem:[#allocation8 + $0x18] sm:$0xff]
        %v686 = vld [vmem:[%s8] sm:$0x1]
        %v688 = vlaneseq
        %v689 = vshrl.u32 %v688, 7
        %v690 = vsub.s32 0, %v689
        %v691 = vrot.slane %v686, %v690
        %693 = vmatprep.subr.mxu0 0.0
        %694 = vmatpush1.msra.mxu0 0.0
        %695 = vmatprep.subr.mxu0 0.0
        %696 = vmatpush1.msra.mxu0 0.0
        %697 = vmatprep.subr.mxu0 0.0
        %698 = vmatpush1.msra.mxu0 0.0
        %699 = vmatprep.subr.mxu0 0.0
        %700 = vmatpush1.msra.mxu0 0.0
        %701 = vmatprep.subr.mxu0 0.0
        %702 = vmatpush1.msra.mxu0 0.0
        %703 = vmatprep.subr.mxu0 0.0
        %704 = vmatpush1.msra.mxu0 0.0
        %705 = vmatprep.subr.mxu0 0.0
        %706 = vmatpush1.msra.mxu0 0.0
        %707 = vmatprep.subr.mxu0 0.0
        %708 = vmatpush1.msra.mxu0 0.0
        %709 = vmatprep.subr.mxu0 0.0
        %710 = vmatpush1.msra.mxu0 0.0
        %711 = vmatprep.subr.mxu0 0.0
        %712 = vmatpush1.msra.mxu0 0.0
        %713 = vmatprep.subr.mxu0 0.0
        %714 = vmatpush1.msra.mxu0 0.0
        %715 = vmatprep.subr.mxu0 0.0
        %716 = vmatpush1.msra.mxu0 0.0
        %717 = vmatprep.subr.mxu0 0.0
        %718 = vmatpush1.msra.mxu0 %v685
        %719 = vmatprep.subr.mxu0 0.0
        %720 = vmatpush1.msra.mxu0 %v684
        %721 = vmatprep.subr.mxu0 0.0
        %722 = vmatpush1.msra.mxu0 %v683
        %723 = vmatprep.subr.mxu0 0.0
        %724 = vmatpush1.msra.mxu0 %v682
        %725 = vmatprep.subr.mxu0 0.0
        %726 = vmatpush2.msra.mxu0 0.0
        %727 = vmatprep.subr.mxu0 0.0
        %728 = vmatpush2.msra.mxu0 0.0
        %729 = vmatprep.subr.mxu0 0.0
        %730 = vmatpush2.msra.mxu0 0.0
        %731 = vmatprep.subr.mxu0 0.0
        %732 = vmatpush2.msra.mxu0 0.0
        %733 = vmatprep.subr.mxu0 0.0
        %734 = vmatpush2.msra.mxu0 0.0
        %735 = vmatprep.subr.mxu0 0.0
        %736 = vmatpush2.msra.mxu0 0.0
        %737 = vmatprep.subr.mxu0 0.0
        %738 = vmatpush2.msra.mxu0 0.0
        %739 = vmatprep.subr.mxu0 0.0
        %740 = vmatpush2.msra.mxu0 0.0
        %741 = vmatprep.subr.mxu0 0.0
        %742 = vmatpush2.msra.mxu0 0.0
        %743 = vmatprep.subr.mxu0 0.0
        %744 = vmatpush2.msra.mxu0 0.0
        %745 = vmatprep.subr.mxu0 0.0
        %746 = vmatpush2.msra.mxu0 0.0
        %747 = vmatprep.subr.mxu0 0.0
        %748 = vmatpush2.msra.mxu0 0.0
        %749 = vmatprep.subr.mxu0 0.0
        %750 = vmatpush2.msra.mxu0 0.0
        %751 = vmatprep.subr.mxu0 0.0
        %752 = vmatpush2.msra.mxu0 0.0
        %753 = vmatprep.subr.mxu0 0.0
        %754 = vmatpush2.msra.mxu0 0.0
        %755 = vmatprep.subr.mxu0 0.0
        %756 = vmatpush2.msra.mxu0 0.0
        %757 = vmatprep.mubr.f32.mxu0 0.0
        %758 = vmatmul.mubr.f32.gmra.mxu0 %v529
        %v759 = vpop.f32.mrf.mxu0
        %v760 = vadd.f32 %v691, %v759
        %v761 = vpop.f32.mrf.mxu0
        %762 = vdwg.mxu0
        %v763 = vmul.f32 %v598, 0.35355338
        %765 = vrot.lane.b32.xlu0 %v763, 120
        %v766 = vpop.permute.xlu0 %765
        %768 = vrot.lane.b32.xlu0 %v763, 112
        %v769 = vpop.permute.xlu0 %768
        %771 = vrot.lane.b32.xlu0 %v763, 104
        %v772 = vpop.permute.xlu0 %771
        %v774 = vcombine.low %v763, %v769
        %v775 = vcombine.high %v763, %v769
        %v777 = vunpack.c.l.s4 1983009808
        %v778 = vunpack.c.0.s8 %v777
        %v779 = vlaneseq
        %v780 = vshrl.u32 %v779, 7
        %v781 = vsub.s32 %v778, %v780
        %v782 = vrot.slane %v774, %v781
        %v784 = vunpack.c.l.s4 1983009808
        %v785 = vunpack.c.0.s8 %v784
        %v786 = vlaneseq
        %v787 = vshrl.u32 %v786, 7
        %v788 = vsub.s32 %v785, %v787
        %v789 = vrot.slane %v775, %v788
        %v790 = vcombine.low %v766, %v772
        %v791 = vcombine.high %v766, %v772
        %v793 = vunpack.c.l.s4 1983009808
        %v794 = vunpack.c.0.s8 %v793
        %v795 = vlaneseq
        %v796 = vshrl.u32 %v795, 7
        %v797 = vsub.s32 %v794, %v796
        %v798 = vrot.slane %v790, %v797
        %v800 = vunpack.c.l.s4 1983009808
        %v801 = vunpack.c.0.s8 %v800
        %v802 = vlaneseq
        %v803 = vshrl.u32 %v802, 7
        %v804 = vsub.s32 %v801, %v803
        %v805 = vrot.slane %v791, %v804
        %v806 = vcombine.low %v782, %v798
        %v807 = vcombine.high %v782, %v798
        %v809 = vunpack.c.l.s4 1934713408
        %v810 = vunpack.c.0.s8 %v809
        %v811 = vlaneseq
        %v812 = vshrl.u32 %v811, 7
        %v813 = vsub.s32 %v810, %v812
        %v814 = vrot.slane %v806, %v813
        %v816 = vunpack.c.l.s4 1934713408
        %v817 = vunpack.c.0.s8 %v816
        %v818 = vlaneseq
        %v819 = vshrl.u32 %v818, 7
        %v820 = vsub.s32 %v817, %v819
        %v821 = vrot.slane %v807, %v820
        %v822 = vcombine.low %v789, %v805
        %v823 = vcombine.high %v789, %v805
        %v825 = vunpack.c.l.s4 1934713408
        %v826 = vunpack.c.0.s8 %v825
        %v827 = vlaneseq
        %v828 = vshrl.u32 %v827, 7
        %v829 = vsub.s32 %v826, %v828
        %v830 = vrot.slane %v822, %v829
        %v832 = vunpack.c.l.s4 1934713408
        %v833 = vunpack.c.0.s8 %v832
        %v834 = vlaneseq
        %v835 = vshrl.u32 %v834, 7
        %v836 = vsub.s32 %v833, %v835
        %v837 = vrot.slane %v823, %v836
        %v838 = vcombine.high %v814, 0.0
        %v839 = vcombine.high %v821, 0.0
        %v840 = vcombine.high %v830, 0.0
        %v841 = vcombine.high %v837, 0.0
        %v842 = vcombine.low %v814, %v821
        %v844 = vunpack.c.l.s4 1983009808
        %v845 = vunpack.c.0.s8 %v844
        %v846 = vlaneseq
        %v847 = vshrl.u32 %v846, 7
        %v848 = vsub.s32 %v845, %v847
        %v849 = vrot.slane %v842, %v848
        %v850 = vcombine.low %v838, %v839
        %v852 = vunpack.c.l.s4 1983009808
        %v853 = vunpack.c.0.s8 %v852
        %v854 = vlaneseq
        %v855 = vshrl.u32 %v854, 7
        %v856 = vsub.s32 %v853, %v855
        %v857 = vrot.slane %v850, %v856
        %v858 = vcombine.low %v830, %v837
        %v860 = vunpack.c.l.s4 1983009808
        %v861 = vunpack.c.0.s8 %v860
        %v862 = vlaneseq
        %v863 = vshrl.u32 %v862, 7
        %v864 = vsub.s32 %v861, %v863
        %v865 = vrot.slane %v858, %v864
        %v866 = vcombine.low %v840, %v841
        %v868 = vunpack.c.l.s4 1983009808
        %v869 = vunpack.c.0.s8 %v868
        %v870 = vlaneseq
        %v871 = vshrl.u32 %v870, 7
        %v872 = vsub.s32 %v869, %v871
        %v873 = vrot.slane %v866, %v872
        %v874 = vcombine.low %v849, %v857
        %v875 = vcombine.high %v849, %v857
        %v877 = vunpack.c.l.s4 1934713408
        %v878 = vunpack.c.0.s8 %v877
        %v879 = vlaneseq
        %v880 = vshrl.u32 %v879, 7
        %v881 = vsub.s32 %v878, %v880
        %v882 = vrot.slane %v874, %v881
        %v884 = vunpack.c.l.s4 1934713408
        %v885 = vunpack.c.0.s8 %v884
        %v886 = vlaneseq
        %v887 = vshrl.u32 %v886, 7
        %v888 = vsub.s32 %v885, %v887
        %v889 = vrot.slane %v875, %v888
        %v890 = vcombine.low %v865, %v873
        %v891 = vcombine.high %v865, %v873
        %v893 = vunpack.c.l.s4 1934713408
        %v894 = vunpack.c.0.s8 %v893
        %v895 = vlaneseq
        %v896 = vshrl.u32 %v895, 7
        %v897 = vsub.s32 %v894, %v896
        %v898 = vrot.slane %v890, %v897
        %v900 = vunpack.c.l.s4 1934713408
        %v901 = vunpack.c.0.s8 %v900
        %v902 = vlaneseq
        %v903 = vshrl.u32 %v902, 7
        %v904 = vsub.s32 %v901, %v903
        %v905 = vrot.slane %v891, %v904
        %v906 = vcombine.low %v882, %v898
        %v907 = vcombine.high %v882, %v898
        %v908 = vcombine.low %v889, %v905
        %v909 = vcombine.high %v889, %v905
        %vm910 = vcmask 64512
        %911 = vst.msk [vmem:[%s470] sm:$0xff] %vm910, %v906
        %912 = vst.msk [vmem:[%s470 + $0x8] sm:$0xff] %vm910, %v907
        %913 = vst.msk [vmem:[%s470 + $0x10] sm:$0xff] %vm910, %v908
        %914 = vst.msk [vmem:[%s470 + $0x18] sm:$0xff] %vm910, %v909
        %916 = vrot.lane.b32.xlu0 %v679, 120
        %v917 = vpop.permute.xlu0 %916
        %919 = vrot.lane.b32.xlu0 %v679, 112
        %v920 = vpop.permute.xlu0 %919
        %922 = vrot.lane.b32.xlu0 %v679, 104
        %v923 = vpop.permute.xlu0 %922
        %v925 = vcombine.low %v679, %v920
        %v926 = vcombine.high %v679, %v920
        %v928 = vunpack.c.l.s4 1983009808
        %v929 = vunpack.c.0.s8 %v928
        %v930 = vlaneseq
        %v931 = vshrl.u32 %v930, 7
        %v932 = vsub.s32 %v929, %v931
        %v933 = vrot.slane %v925, %v932
        %v935 = vunpack.c.l.s4 1983009808
        %v936 = vunpack.c.0.s8 %v935
        %v937 = vlaneseq
        %v938 = vshrl.u32 %v937, 7
        %v939 = vsub.s32 %v936, %v938
        %v940 = vrot.slane %v926, %v939
        %v941 = vcombine.low %v917, %v923
        %v942 = vcombine.high %v917, %v923
        %v944 = vunpack.c.l.s4 1983009808
        %v945 = vunpack.c.0.s8 %v944
        %v946 = vlaneseq
        %v947 = vshrl.u32 %v946, 7
        %v948 = vsub.s32 %v945, %v947
        %v949 = vrot.slane %v941, %v948
        %v951 = vunpack.c.l.s4 1983009808
        %v952 = vunpack.c.0.s8 %v951
        %v953 = vlaneseq
        %v954 = vshrl.u32 %v953, 7
        %v955 = vsub.s32 %v952, %v954
        %v956 = vrot.slane %v942, %v955
        %v957 = vcombine.low %v933, %v949
        %v958 = vcombine.high %v933, %v949
        %v960 = vunpack.c.l.s4 1934713408
        %v961 = vunpack.c.0.s8 %v960
        %v962 = vlaneseq
        %v963 = vshrl.u32 %v962, 7
        %v964 = vsub.s32 %v961, %v963
        %v965 = vrot.slane %v957, %v964
        %v967 = vunpack.c.l.s4 1934713408
        %v968 = vunpack.c.0.s8 %v967
        %v969 = vlaneseq
        %v970 = vshrl.u32 %v969, 7
        %v971 = vsub.s32 %v968, %v970
        %v972 = vrot.slane %v958, %v971
        %v973 = vcombine.low %v940, %v956
        %v974 = vcombine.high %v940, %v956
        %v976 = vunpack.c.l.s4 1934713408
        %v977 = vunpack.c.0.s8 %v976
        %v978 = vlaneseq
        %v979 = vshrl.u32 %v978, 7
        %v980 = vsub.s32 %v977, %v979
        %v981 = vrot.slane %v973, %v980
        %v983 = vunpack.c.l.s4 1934713408
        %v984 = vunpack.c.0.s8 %v983
        %v985 = vlaneseq
        %v986 = vshrl.u32 %v985, 7
        %v987 = vsub.s32 %v984, %v986
        %v988 = vrot.slane %v974, %v987
        %v989 = vcombine.high %v965, 0.0
        %v990 = vcombine.high %v972, 0.0
        %v991 = vcombine.high %v981, 0.0
        %v992 = vcombine.high %v988, 0.0
        %v993 = vcombine.low %v965, %v972
        %v995 = vunpack.c.l.s4 1983009808
        %v996 = vunpack.c.0.s8 %v995
        %v997 = vlaneseq
        %v998 = vshrl.u32 %v997, 7
        %v999 = vsub.s32 %v996, %v998
        %v1000 = vrot.slane %v993, %v999
        %v1001 = vcombine.low %v989, %v990
        %v1003 = vunpack.c.l.s4 1983009808
        %v1004 = vunpack.c.0.s8 %v1003
        %v1005 = vlaneseq
        %v1006 = vshrl.u32 %v1005, 7
        %v1007 = vsub.s32 %v1004, %v1006
        %v1008 = vrot.slane %v1001, %v1007
        %v1009 = vcombine.low %v981, %v988
        %v1011 = vunpack.c.l.s4 1983009808
        %v1012 = vunpack.c.0.s8 %v1011
        %v1013 = vlaneseq
        %v1014 = vshrl.u32 %v1013, 7
        %v1015 = vsub.s32 %v1012, %v1014
        %v1016 = vrot.slane %v1009, %v1015
        %v1017 = vcombine.low %v991, %v992
        %v1019 = vunpack.c.l.s4 1983009808
        %v1020 = vunpack.c.0.s8 %v1019
        %v1021 = vlaneseq
        %v1022 = vshrl.u32 %v1021, 7
        %v1023 = vsub.s32 %v1020, %v1022
        %v1024 = vrot.slane %v1017, %v1023
        %v1025 = vcombine.low %v1000, %v1008
        %v1026 = vcombine.high %v1000, %v1008
        %v1028 = vunpack.c.l.s4 1934713408
        %v1029 = vunpack.c.0.s8 %v1028
        %v1030 = vlaneseq
        %v1031 = vshrl.u32 %v1030, 7
        %v1032 = vsub.s32 %v1029, %v1031
        %v1033 = vrot.slane %v1025, %v1032
        %v1035 = vunpack.c.l.s4 1934713408
        %v1036 = vunpack.c.0.s8 %v1035
        %v1037 = vlaneseq
        %v1038 = vshrl.u32 %v1037, 7
        %v1039 = vsub.s32 %v1036, %v1038
        %v1040 = vrot.slane %v1026, %v1039
        %v1041 = vcombine.low %v1016, %v1024
        %v1042 = vcombine.high %v1016, %v1024
        %v1044 = vunpack.c.l.s4 1934713408
        %v1045 = vunpack.c.0.s8 %v1044
        %v1046 = vlaneseq
        %v1047 = vshrl.u32 %v1046, 7
        %v1048 = vsub.s32 %v1045, %v1047
        %v1049 = vrot.slane %v1041, %v1048
        %v1051 = vunpack.c.l.s4 1934713408
        %v1052 = vunpack.c.0.s8 %v1051
        %v1053 = vlaneseq
        %v1054 = vshrl.u32 %v1053, 7
        %v1055 = vsub.s32 %v1052, %v1054
        %v1056 = vrot.slane %v1042, %v1055
        %v1057 = vcombine.low %v1033, %v1049
        %v1058 = vcombine.high %v1033, %v1049
        %v1059 = vcombine.low %v1040, %v1056
        %v1060 = vcombine.high %v1040, %v1056
        %1061 = vst.msk [vmem:[%s477] sm:$0xff] %vm910, %v1057
        %1062 = vst.msk [vmem:[%s477 + $0x8] sm:$0xff] %vm910, %v1058
        %1063 = vst.msk [vmem:[%s477 + $0x10] sm:$0xff] %vm910, %v1059
        %1064 = vst.msk [vmem:[%s477 + $0x18] sm:$0xff] %vm910, %v1060
        %1066 = vrot.lane.b32.xlu0 %v760, 120
        %v1067 = vpop.permute.xlu0 %1066
        %1069 = vrot.lane.b32.xlu0 %v760, 112
        %v1070 = vpop.permute.xlu0 %1069
        %1072 = vrot.lane.b32.xlu0 %v760, 104
        %v1073 = vpop.permute.xlu0 %1072
        %v1075 = vcombine.low %v760, %v1070
        %v1076 = vcombine.high %v760, %v1070
        %v1078 = vunpack.c.l.s4 1983009808
        %v1079 = vunpack.c.0.s8 %v1078
        %v1080 = vlaneseq
        %v1081 = vshrl.u32 %v1080, 7
        %v1082 = vsub.s32 %v1079, %v1081
        %v1083 = vrot.slane %v1075, %v1082
        %v1085 = vunpack.c.l.s4 1983009808
        %v1086 = vunpack.c.0.s8 %v1085
        %v1087 = vlaneseq
        %v1088 = vshrl.u32 %v1087, 7
        %v1089 = vsub.s32 %v1086, %v1088
        %v1090 = vrot.slane %v1076, %v1089
        %v1091 = vcombine.low %v1067, %v1073
        %v1092 = vcombine.high %v1067, %v1073
        %v1094 = vunpack.c.l.s4 1983009808
        %v1095 = vunpack.c.0.s8 %v1094
        %v1096 = vlaneseq
        %v1097 = vshrl.u32 %v1096, 7
        %v1098 = vsub.s32 %v1095, %v1097
        %v1099 = vrot.slane %v1091, %v1098
        %v1101 = vunpack.c.l.s4 1983009808
        %v1102 = vunpack.c.0.s8 %v1101
        %v1103 = vlaneseq
        %v1104 = vshrl.u32 %v1103, 7
        %v1105 = vsub.s32 %v1102, %v1104
        %v1106 = vrot.slane %v1092, %v1105
        %v1107 = vcombine.low %v1083, %v1099
        %v1108 = vcombine.high %v1083, %v1099
        %v1110 = vunpack.c.l.s4 1934713408
        %v1111 = vunpack.c.0.s8 %v1110
        %v1112 = vlaneseq
        %v1113 = vshrl.u32 %v1112, 7
        %v1114 = vsub.s32 %v1111, %v1113
        %v1115 = vrot.slane %v1107, %v1114
        %v1117 = vunpack.c.l.s4 1934713408
        %v1118 = vunpack.c.0.s8 %v1117
        %v1119 = vlaneseq
        %v1120 = vshrl.u32 %v1119, 7
        %v1121 = vsub.s32 %v1118, %v1120
        %v1122 = vrot.slane %v1108, %v1121
        %v1123 = vcombine.low %v1090, %v1106
        %v1124 = vcombine.high %v1090, %v1106
        %v1126 = vunpack.c.l.s4 1934713408
        %v1127 = vunpack.c.0.s8 %v1126
        %v1128 = vlaneseq
        %v1129 = vshrl.u32 %v1128, 7
        %v1130 = vsub.s32 %v1127, %v1129
        %v1131 = vrot.slane %v1123, %v1130
        %v1133 = vunpack.c.l.s4 1934713408
        %v1134 = vunpack.c.0.s8 %v1133
        %v1135 = vlaneseq
        %v1136 = vshrl.u32 %v1135, 7
        %v1137 = vsub.s32 %v1134, %v1136
        %v1138 = vrot.slane %v1124, %v1137
        %v1139 = vcombine.high %v1115, 0.0
        %v1140 = vcombine.high %v1122, 0.0
        %v1141 = vcombine.high %v1131, 0.0
        %v1142 = vcombine.high %v1138, 0.0
        %v1143 = vcombine.low %v1115, %v1122
        %v1145 = vunpack.c.l.s4 1983009808
        %v1146 = vunpack.c.0.s8 %v1145
        %v1147 = vlaneseq
        %v1148 = vshrl.u32 %v1147, 7
        %v1149 = vsub.s32 %v1146, %v1148
        %v1150 = vrot.slane %v1143, %v1149
        %v1151 = vcombine.low %v1139, %v1140
        %v1153 = vunpack.c.l.s4 1983009808
        %v1154 = vunpack.c.0.s8 %v1153
        %v1155 = vlaneseq
        %v1156 = vshrl.u32 %v1155, 7
        %v1157 = vsub.s32 %v1154, %v1156
        %v1158 = vrot.slane %v1151, %v1157
        %v1159 = vcombine.low %v1131, %v1138
        %v1161 = vunpack.c.l.s4 1983009808
        %v1162 = vunpack.c.0.s8 %v1161
        %v1163 = vlaneseq
        %v1164 = vshrl.u32 %v1163, 7
        %v1165 = vsub.s32 %v1162, %v1164
        %v1166 = vrot.slane %v1159, %v1165
        %v1167 = vcombine.low %v1141, %v1142
        %v1169 = vunpack.c.l.s4 1983009808
        %v1170 = vunpack.c.0.s8 %v1169
        %v1171 = vlaneseq
        %v1172 = vshrl.u32 %v1171, 7
        %v1173 = vsub.s32 %v1170, %v1172
        %v1174 = vrot.slane %v1167, %v1173
        %v1175 = vcombine.low %v1150, %v1158
        %v1176 = vcombine.high %v1150, %v1158
        %v1178 = vunpack.c.l.s4 1934713408
        %v1179 = vunpack.c.0.s8 %v1178
        %v1180 = vlaneseq
        %v1181 = vshrl.u32 %v1180, 7
        %v1182 = vsub.s32 %v1179, %v1181
        %v1183 = vrot.slane %v1175, %v1182
        %v1185 = vunpack.c.l.s4 1934713408
        %v1186 = vunpack.c.0.s8 %v1185
        %v1187 = vlaneseq
        %v1188 = vshrl.u32 %v1187, 7
        %v1189 = vsub.s32 %v1186, %v1188
        %v1190 = vrot.slane %v1176, %v1189
        %v1191 = vcombine.low %v1166, %v1174
        %v1192 = vcombine.high %v1166, %v1174
        %v1194 = vunpack.c.l.s4 1934713408
        %v1195 = vunpack.c.0.s8 %v1194
        %v1196 = vlaneseq
        %v1197 = vshrl.u32 %v1196, 7
        %v1198 = vsub.s32 %v1195, %v1197
        %v1199 = vrot.slane %v1191, %v1198
        %v1201 = vunpack.c.l.s4 1934713408
        %v1202 = vunpack.c.0.s8 %v1201
        %v1203 = vlaneseq
        %v1204 = vshrl.u32 %v1203, 7
        %v1205 = vsub.s32 %v1202, %v1204
        %v1206 = vrot.slane %v1192, %v1205
        %v1207 = vcombine.low %v1183, %v1199
        %v1208 = vcombine.high %v1183, %v1199
        %v1209 = vcombine.low %v1190, %v1206
        %v1210 = vcombine.high %v1190, %v1206
        %1211 = vst.msk [vmem:[%s484] sm:$0xff] %vm910, %v1207
        %1212 = vst.msk [vmem:[%s484 + $0x8] sm:$0xff] %vm910, %v1208
        %1213 = vst.msk [vmem:[%s484 + $0x10] sm:$0xff] %vm910, %v1209
        %1214 = vst.msk [vmem:[%s484 + $0x18] sm:$0xff] %vm910, %v1210
        %s1215 = sand.u32 %s252, 1
        %s1216 = scalar_lea.sflag [#allocation4], %s1215
        %s1217 = sand.u32 %s252, 1
        %s1218 = smul.addr %s1217, 32
        %s1219 = scalar_lea.vmem [#allocation10], %s1218
        %s1220 = sand.u32 %s34, 1
        %s1221 = scalar_lea.sflag [#allocation12], %s1220
        %s1222 = sand.u32 %s280, 1
        %s1223 = smul.addr %s1222, 32
        %s1224 = scalar_lea.vmem [#allocation11], %s1223
        %s1225 = sand.u32 %s34, 1
        %s1226 = scalar_lea.sflag [#allocation12], %s1225
        %s1227 = sand.u32 %s308, 1
        %s1228 = smul.addr %s1227, 32
        %s1229 = scalar_lea.vmem [#allocation13], %s1228
        // Predicated region
        $region73: #{tpu_custom_call.1} parent=55 // pred_check
          %p1230 = pneg %p262
        $region74: #{tpu_custom_call.1} parent=55 // pred_check_branch
          %1232 = sbr.rel (%p1230) target = $region76
        $region75: #{tpu_custom_call.1} parent=55 // pred_region
          %s1234 = ssub.s32 512, 512
          %1235 = vsyncadd %s1216, %s1234
          %s1236 = smul.addr %s38, 4
          %s1237 = sadd.s32 %s39, %s1236
          %s1238 = smul.addr %s1237, 128
          %s1239 = scalar_lea.hbm %s9, %s1238
          %s1240 = sshll.u32 %s1219, 4
          %s1241 = int_to_ptr.vmem [resolvable:$true] %s1240
          %1246 = dma.vmem_to_hbm [thread:$0]  %s1241, 512, %s1239, %s1216, 128, 128, 8
        $region76: #{tpu_custom_call.1} parent=55 // pred_fallthru
          _
        // Predicated region
        $region77: #{tpu_custom_call.1} parent=55 // pred_check
          %p1247 = pneg %p290
        $region78: #{tpu_custom_call.1} parent=55 // pred_check_branch
          %1249 = sbr.rel (%p1247) target = $region80
        $region79: #{tpu_custom_call.1} parent=55 // pred_region
          %s1251 = ssub.s32 512, 512
          %1252 = vsyncadd %s1221, %s1251
          %s1253 = smul.addr %s38, 4
          %s1254 = sadd.s32 %s39, %s1253
          %s1255 = smul.addr %s1254, 128
          %s1256 = scalar_lea.hbm %s10, %s1255
          %s1257 = sshll.u32 %s1224, 4
          %s1258 = int_to_ptr.vmem [resolvable:$true] %s1257
          %1263 = dma.vmem_to_hbm [thread:$0]  %s1258, 512, %s1256, %s1221, 128, 128, 8
        $region80: #{tpu_custom_call.1} parent=55 // pred_fallthru
          _
        // Predicated region
        $region81: #{tpu_custom_call.1} parent=55 // pred_check
          %p1264 = pneg %p318
        $region82: #{tpu_custom_call.1} parent=55 // pred_check_branch
          %1266 = sbr.rel (%p1264) target = $region84
        $region83: #{tpu_custom_call.1} parent=55 // pred_region
          %s1268 = ssub.s32 512, 512
          %1269 = vsyncadd %s1226, %s1268
          %s1270 = smul.addr %s38, 4
          %s1271 = sadd.s32 %s39, %s1270
          %s1272 = smul.addr %s1271, 128
          %s1273 = scalar_lea.hbm %s11, %s1272
          %s1274 = sshll.u32 %s1229, 4
          %s1275 = int_to_ptr.vmem [resolvable:$true] %s1274
          %1280 = dma.vmem_to_hbm [thread:$0]  %s1275, 512, %s1273, %s1226, 128, 128, 8
        $region84: #{tpu_custom_call.1} parent=55 // pred_fallthru
          _
      $region56: #{tpu_custom_call.1} parent=5 // pred_fallthru
        _
      %p1281 = scmp.le.s32.totalorder 2, %s29
      // Predicated region
      $region85: #{tpu_custom_call.1} parent=5 // pred_check
        %p1282 = pneg %p1281
      $region86: #{tpu_custom_call.1} parent=5 // pred_check_branch
        %1284 = sbr.rel (%p1282) target = $region88
      $region87: #{tpu_custom_call.1} parent=5 // pred_region
        %s1285 = ssub.s32 %s29, 2
        // Predicated region
        $region89: #{tpu_custom_call.1} parent=87 // pred_check
          %p1286 = pneg %p268
        $region90: #{tpu_custom_call.1} parent=87 // pred_check_branch
          %1288 = sbr.rel (%p1286) target = $region92
        $region91: #{tpu_custom_call.1} parent=87 // pred_region
          %s1289 = sand.u32 %s253, 1
          %s1290 = scalar_lea.sflag [#allocation4], %s1289
          %s1291 = sand.u32 %s253, 1
          %s1292 = smul.addr %s1291, 32
          %s1293 = scalar_lea.vmem [#allocation10], %s1292
          %1294 = dma.done %s1290, 512
        $region92: #{tpu_custom_call.1} parent=87 // pred_fallthru
          _
        // Predicated region
        $region93: #{tpu_custom_call.1} parent=87 // pred_check
          %p1295 = pneg %p296
        $region94: #{tpu_custom_call.1} parent=87 // pred_check_branch
          %1297 = sbr.rel (%p1295) target = $region96
        $region95: #{tpu_custom_call.1} parent=87 // pred_region
          %s1298 = sand.u32 %s35, 1
          %s1299 = scalar_lea.sflag [#allocation12], %s1298
          %s1300 = sand.u32 %s281, 1
          %s1301 = smul.addr %s1300, 32
          %s1302 = scalar_lea.vmem [#allocation11], %s1301
          %1303 = dma.done %s1299, 512
        $region96: #{tpu_custom_call.1} parent=87 // pred_fallthru
          _
        // Predicated region
        $region97: #{tpu_custom_call.1} parent=87 // pred_check
          %p1304 = pneg %p324
        $region98: #{tpu_custom_call.1} parent=87 // pred_check_branch
          %1306 = sbr.rel (%p1304) target = $region100
        $region99: #{tpu_custom_call.1} parent=87 // pred_region
          %s1307 = sand.u32 %s35, 1
          %s1308 = scalar_lea.sflag [#allocation12], %s1307
          %s1309 = sand.u32 %s309, 1
          %s1310 = smul.addr %s1309, 32
          %s1311 = scalar_lea.vmem [#allocation13], %s1310
          %1312 = dma.done %s1308, 512
        $region100: #{tpu_custom_call.1} parent=87 // pred_fallthru
          _
      $region88: #{tpu_custom_call.1} parent=5 // pred_fallthru
        _
    $region6: #{tpu_custom_call.1} parent=1 // loop_footer
      %s33 = sadd.s32 1, %s29
    $region7: #{tpu_custom_call.1} parent=1 // loop_footer_branch
      %28 = sbr.rel target = $region3
    $region8: #{tpu_custom_call.1} parent=1 // loop_exit
      _
    %1313 = vsyncpa [#allocation3], 1
    %s1314 = scalar_lea.sflag [#allocation3], 1
    %1315 = vsyncpa %s1314, 1
    %1316 = vsyncpa [#allocation6], 1
    %1317 = vsyncpa [#allocation9], 1
    %1318 = vsyncpa [#allocation4], 1
    %s1319 = scalar_lea.sflag [#allocation4], 1
    %1320 = vsyncpa %s1319, 1
    %1321 = vsyncpa [#allocation12], 1
    %s1322 = scalar_lea.sflag [#allocation12], 1
    %1323 = vsyncpa %s1322, 1

</llo_original>
